<compile_context>
chip_gen: v7x
topology: tpu7x:2x2x1
jax: 0.10.0
libtpu: 0.0.40
codegen_flags: <defaults>
</compile_context>

<pallas_src>
import functools

import jax
import jax.numpy as jnp
from jax.experimental import pallas as pl
from jax.experimental.pallas import tpu as pltpu


# ----------------------------------------------------------------------------
# Phase 1: edge aggregation (reduce over node tiles into resident e[T, M, hid])
# ----------------------------------------------------------------------------
def edge_agg_kernel(x_ref, h_ref, binv_ref, theta_ref, e_ref):
  f32 = jnp.float32
  num_types = h_ref.shape[0]
  hid = e_ref.shape[2]

  @pl.when(pl.program_id(0) == 0)
  def _():
    e_ref[...] = jnp.zeros_like(e_ref)

  # one wide matmul for all edge types (K = in_dim is tiny, amortize MXU issue)
  xt_all = jnp.dot(x_ref[...], theta_ref[...], preferred_element_type=f32)

  for t in range(num_types):                     # static unroll over edge types
    xt = xt_all[:, t * hid:(t + 1) * hid]                       # [tn, hid]
    ht = h_ref[t].astype(f32)                                   # [tn, M]
    # H_t_tile^T @ xt  (contract the node-tile axis of both operands)
    contrib = jax.lax.dot_general(ht, xt, (((0,), (0,)), ((), ())),
                                  preferred_element_type=f32)   # [M, hid]
    # B^{-1} scaling is per hyperedge row -> apply to the partial contribution
    e_ref[t] += binv_ref[t] * contrib


# ----------------------------------------------------------------------------
# Phase 2: node update (parallel over node tiles): conv-out, lin_mix, GRU, readout
# ----------------------------------------------------------------------------
def node_update_kernel(h_ref, dinv_ref, e_ref, cbias_ref, wmix_ref, bmix_ref,
                       wih_ref, bih_ref, whh_ref, bhh_ref,
                       hprev_ref, wr_ref, br_ref,
                       hnext_ref, out_ref):
  f32 = jnp.float32
  num_types = h_ref.shape[0]
  tile_n = h_ref.shape[1]
  hid = hnext_ref.shape[1]

  e_bf = e_ref[...].astype(jnp.bfloat16)                        # [T, M, hid]

  # per-type conv node output folded straight into the lin_mix accumulation
  # (avoids the lane-repacking concatenate along a 32-lane minor axis)
  acc = jnp.zeros((tile_n, hid), f32)
  for t in range(num_types):
    node = jnp.dot(h_ref[t], e_bf[t], preferred_element_type=f32)  # [tn, hid]
    node = node * dinv_ref[t] + cbias_ref[t]
    acc = acc + jnp.dot(node, wmix_ref[t], preferred_element_type=f32)
  h = jnp.maximum(acc + bmix_ref[...], 0.0)                     # relu(lin_mix)

  # GRUCell with fused gate matmuls (PyTorch gate order r, z, n)
  hprev = hprev_ref[...]
  gi = jnp.dot(h, wih_ref[...], preferred_element_type=f32) + bih_ref[...]
  gh = jnp.dot(hprev, whh_ref[...], preferred_element_type=f32) + bhh_ref[...]
  r = jax.nn.sigmoid(gi[:, :hid] + gh[:, :hid])
  z = jax.nn.sigmoid(gi[:, hid:2 * hid] + gh[:, hid:2 * hid])
  n = jnp.tanh(gi[:, 2 * hid:] + r * gh[:, 2 * hid:])
  h_next = (1.0 - z) * n + z * hprev

  hnext_ref[...] = h_next
  out_ref[...] = (jnp.dot(h_next, wr_ref[...], preferred_element_type=f32)
                  + br_ref[...])


# ----------------------------------------------------------------------------
# Wrapper: dense incidence + degree norms (glue), tiled pallas calls, [:, :3]
# ----------------------------------------------------------------------------
def dyn_growing_hnn_forward(x, edge_index, edge_attr, params, state_prev=None,
                            tile_n=16):
  """Mirrors DynGrowingHNN.forward; returns (state_next, out)."""
  N, in_dim = x.shape
  T = params["cbias"].shape[0]
  hid = params["cbias"].shape[2]
  rdim = params["wr"].shape[1]
  M = int(params["num_hyperedges"])
  f32 = jnp.float32

  # Dense incidence per edge type; scatter-add counts multiplicity (matches
  # PyG scatter_add semantics).  Degree normalization precomputed here so the
  # kernels never reduce over H.
  H = jnp.zeros((T, N, M), f32)
  H = H.at[edge_attr, edge_index[0], edge_index[1]].add(1.0)
  deg_n = jnp.sum(H, axis=2, keepdims=True)                     # [T, N, 1]
  deg_e = jnp.sum(H, axis=1, keepdims=True)                     # [T, 1, M]
  dinv = jnp.where(deg_n > 0, 1.0 / deg_n, 0.0)                 # [T, N, 1]
  binv = jnp.swapaxes(jnp.where(deg_e > 0, 1.0 / deg_e, 0.0), 1, 2)  # [T, M, 1]
  H_bf = H.astype(jnp.bfloat16)        # incidence counts <= 256 exact in bf16

  hprev = jnp.zeros((N, hid), f32) if state_prev is None else state_prev

  # pad the node axis to a multiple of tile_n (zero rows contribute nothing)
  Np = ((N + tile_n - 1) // tile_n) * tile_n
  pad = Np - N
  if pad:
    x = jnp.pad(x, ((0, pad), (0, 0)))
    H_bf = jnp.pad(H_bf, ((0, 0), (0, pad), (0, 0)))
    dinv = jnp.pad(dinv, ((0, 0), (0, pad), (0, 0)))
    hprev = jnp.pad(hprev, ((0, pad), (0, 0)))
  n_tiles = Np // tile_n

  # ---------------- phase 1: edge aggregation ----------------
  e = pl.pallas_call(
      edge_agg_kernel,
      out_shape=jax.ShapeDtypeStruct((T, M, hid), f32),
      grid=(n_tiles,),
      in_specs=[
          pl.BlockSpec((tile_n, in_dim), lambda i: (i, 0)),        # x tile
          pl.BlockSpec((T, tile_n, M), lambda i: (0, i, 0)),       # H tile (bf16)
          pl.BlockSpec((T, M, 1), lambda i: (0, 0, 0)),            # Binv
          pl.BlockSpec((in_dim, T * hid), lambda i: (0, 0)),       # theta_all
      ],
      out_specs=pl.BlockSpec((T, M, hid), lambda i: (0, 0, 0)),    # accumulator
      compiler_params=pltpu.CompilerParams(
          dimension_semantics=("arbitrary",)),
  )(x, H_bf, binv, params["theta_all"])

  # ---------------- phase 2: node update ----------------
  h_next, out_full = pl.pallas_call(
      node_update_kernel,
      out_shape=(
          jax.ShapeDtypeStruct((Np, hid), f32),
          jax.ShapeDtypeStruct((Np, rdim), f32),
      ),
      grid=(n_tiles,),
      in_specs=[
          pl.BlockSpec((T, tile_n, M), lambda i: (0, i, 0)),       # H tile (bf16)
          pl.BlockSpec((T, tile_n, 1), lambda i: (0, i, 0)),       # Dinv tile
          pl.BlockSpec((T, M, hid), lambda i: (0, 0, 0)),          # e
          pl.BlockSpec((T, 1, hid), lambda i: (0, 0, 0)),          # conv bias
          pl.BlockSpec((T, hid, hid), lambda i: (0, 0, 0)),        # wmix (per type)
          pl.BlockSpec((1, hid), lambda i: (0, 0)),                # bmix
          pl.BlockSpec((hid, 3 * hid), lambda i: (0, 0)),          # w_ih fused
          pl.BlockSpec((1, 3 * hid), lambda i: (0, 0)),            # b_ih fused
          pl.BlockSpec((hid, 3 * hid), lambda i: (0, 0)),          # w_hh fused
          pl.BlockSpec((1, 3 * hid), lambda i: (0, 0)),            # b_hh fused
          pl.BlockSpec((tile_n, hid), lambda i: (i, 0)),           # h_prev tile
          pl.BlockSpec((hid, rdim), lambda i: (0, 0)),             # readout W
          pl.BlockSpec((1, rdim), lambda i: (0, 0)),               # readout b
      ],
      out_specs=(
          pl.BlockSpec((tile_n, hid), lambda i: (i, 0)),           # h_next
          pl.BlockSpec((tile_n, rdim), lambda i: (i, 0)),          # readout
      ),
      input_output_aliases={10: 0},       # h_prev updated in place -> h_next
      compiler_params=pltpu.CompilerParams(
          dimension_semantics=("parallel",)),
  )(H_bf, dinv, e, params["cbias"], params["wmix"], params["bmix"],
    params["w_ih"], params["b_ih"], params["w_hh"], params["b_hh"],
    hprev, params["wr"], params["br"])

  state_next = h_next[:N]
  out = out_full[:N, :3]     # glue: torch does readout(h_next)[:, :3]
  return state_next, out


# ----------------------------------------------------------------------------
# Deterministic parameter init (shapes from DynGrowingHNN.__init__, fused layout)
# ----------------------------------------------------------------------------
def make_params(key, in_dim, hid, readout_dim, num_edge_types, num_hyperedges):
  ks = jax.random.split(key, 12)
  s = 0.1

  def nrm(k, shape):
    return (s * jax.random.normal(k, shape)).astype(jnp.float32)

  T = num_edge_types
  p = {
      # HypergraphConv lin weights, fused across edge types: [in_dim, T*hid]
      "theta_all": nrm(ks[0], (in_dim, T * hid)),
      "cbias":     nrm(ks[1], (T, 1, hid)),
      # lin_mix weight split per edge type: [T, hid, hid]  (== [T*hid, hid] rows)
      "wmix":      nrm(ks[2], (T, hid, hid)),
      "bmix":      nrm(ks[3], (1, hid)),
      # GRUCell weights fused across gates, order [r | z | n]
      "w_ih":      nrm(ks[4], (hid, 3 * hid)),
      "w_hh":      nrm(ks[5], (hid, 3 * hid)),
      "b_ih":      nrm(ks[6], (1, 3 * hid)),
      "b_hh":      nrm(ks[7], (1, 3 * hid)),
      "wr":        nrm(ks[8], (hid, readout_dim)),
      "br":        jnp.zeros((1, readout_dim), jnp.float32),
      "num_hyperedges": num_hyperedges,
  }
  return p


if __name__ == "__main__":
  # small shapes: 32 nodes, in_dim=4, hid_dim=32, readout_dim=32,
  # 2 edge types, 8 hyperedges, 48 (node, hyperedge) incidences.
  # tile_n=16 -> a 2-step grid on both phases.
  N, IN_DIM, HID, RDIM = 32, 4, 32, 32
  T, M, E = 2, 8, 48

  key = jax.random.PRNGKey(0)
  kx, ke0, ke1, ka, kp = jax.random.split(key, 5)

  x = jax.random.normal(kx, (N, IN_DIM), jnp.float32)
  edge_index = jnp.stack([
      jax.random.randint(ke0, (E,), 0, N),   # node ids
      jax.random.randint(ke1, (E,), 0, M),   # hyperedge ids
  ], axis=0)
  edge_attr = jax.random.randint(ka, (E,), 0, T)

  params = make_params(kp, IN_DIM, HID, RDIM, T, M)

  fwd = jax.jit(functools.partial(dyn_growing_hnn_forward, params=params))
  state_next, out = fwd(x, edge_index, edge_attr)
  jax.block_until_ready((state_next, out))

  assert state_next.shape == (N, HID)
  assert out.shape == (N, 3)
  print("KERNEL_OK")
</pallas_src>

<mosaic_0001>
module attributes {stable_mosaic.version = 11 : i64} {
  func.func private @main(%arg0: i32) attributes {dimension_semantics = [#tpu.dimension_semantics<core_parallel>], iteration_bounds = array<i64: 2>, tpu.core_type = #tpu.core_type<sc_scalar_subcore>, window_params = []} {
    return
  }
}

module attributes {stable_mosaic.version = 11 : i64} {
  func.func private @main(%arg0: i32) attributes {dimension_semantics = [#tpu.dimension_semantics<core_parallel>], iteration_bounds = array<i64: 2>, tpu.core_type = #tpu.core_type<sc_scalar_subcore>, window_params = []} {
    return
  }
}

module attributes {stable_mosaic.version = 11 : i64} {
  func.func @edge_agg_kernel(%arg0: i32, %arg1: memref<16x4xf32, #tpu.memory_space<vmem>>, %arg2: memref<2x16x8xbf16, #tpu.memory_space<vmem>>, %arg3: memref<2x8x1xf32, #tpu.memory_space<vmem>>, %arg4: memref<4x64xf32, #tpu.memory_space<vmem>>, %arg5: memref<2x8x32xf32, #tpu.memory_space<vmem>>) attributes {dimension_semantics = [#tpu.dimension_semantics<arbitrary>], iteration_bounds = array<i64: 2>, scalar_prefetch = 0 : i64, scratch_operands = 0 : i64, tpu.core_type = #tpu.core_type<tc>, window_params = [{transform_indices = @transform_0, window_bounds = array<i64: 16, 4>}, {transform_indices = @transform_1, window_bounds = array<i64: 2, 16, 8>}, {pipeline_mode = #tpu.pipeline_mode<synchronous>, transform_indices = @transform_2, window_bounds = array<i64: 2, 8, 1>}, {pipeline_mode = #tpu.pipeline_mode<synchronous>, transform_indices = @transform_3, window_bounds = array<i64: 4, 64>}, {pipeline_mode = #tpu.pipeline_mode<synchronous>, transform_indices = @transform_4, window_bounds = array<i64: 2, 8, 32>}]} {
    %c0_i32 = arith.constant 0 : i32
    %0 = arith.cmpi eq, %arg0, %c0_i32 : i32
    %1 = arith.extui %0 : i1 to i32
    %c0_i32_0 = arith.constant 0 : i32
    %2 = arith.cmpi ne, %1, %c0_i32_0 : i32
    scf.if %2 {
      %cst_29 = arith.constant 0.000000e+00 : f32
      %36 = vector.broadcast %cst_29 : f32 to vector<2x8x32xf32>
      %c0_30 = arith.constant 0 : index
      %c0_31 = arith.constant 0 : index
      %c0_32 = arith.constant 0 : index
      %37 = vector.load %arg5[%c0_30, %c0_31, %c0_32] : memref<2x8x32xf32, #tpu.memory_space<vmem>>, vector<2x8x32xf32>
      tpu.vector_store %arg5[%c0_30, %c0_31, %c0_32], %36 {strides = array<i32>} : memref<2x8x32xf32, #tpu.memory_space<vmem>>, vector<2x8x32xf32>,
    } else {
    }
    %c0 = arith.constant 0 : index
    %c0_1 = arith.constant 0 : index
    %3 = vector.load %arg1[%c0, %c0_1] : memref<16x4xf32, #tpu.memory_space<vmem>>, vector<16x4xf32>
    %c0_2 = arith.constant 0 : index
    %c0_3 = arith.constant 0 : index
    %4 = vector.load %arg4[%c0_2, %c0_3] : memref<4x64xf32, #tpu.memory_space<vmem>>, vector<4x64xf32>
    %cst = arith.constant dense<0.000000e+00> : vector<16x64xf32>
    %5 = tpu.matmul %3, %4, %cst {dimension_numbers = #tpu.dot_dimension_numbers<[1], [0], [0], [1], [0, 0, 1, 1], [], []>} : vector<16x4xf32>, vector<4x64xf32>, vector<16x64xf32> -> vector<16x64xf32>
    %6 = vector.extract_strided_slice %5 {offsets = [0, 0], sizes = [16, 32], strides = [1, 1]} : vector<16x64xf32> to vector<16x32xf32>
    %c0_4 = arith.constant 0 : index
    %c0_5 = arith.constant 0 : index
    %c0_6 = arith.constant 0 : index
    %7 = vector.load %arg2[%c0_4, %c0_5, %c0_6] : memref<2x16x8xbf16, #tpu.memory_space<vmem>>, vector<1x16x8xbf16>
    %8 = vector.shape_cast %7 : vector<1x16x8xbf16> to vector<16x8xbf16>
    %9 = arith.extf %8 : vector<16x8xbf16> to vector<16x8xf32>
    %cst_7 = arith.constant dense<0.000000e+00> : vector<8x32xf32>
    %10 = tpu.matmul %9, %6, %cst_7 {dimension_numbers = #tpu.dot_dimension_numbers<[0], [0], [1], [1], [0, 1, 1, 1], [], []>} : vector<16x8xf32>, vector<16x32xf32>, vector<8x32xf32> -> vector<8x32xf32>
    %c0_8 = arith.constant 0 : index
    %c0_9 = arith.constant 0 : index
    %c0_10 = arith.constant 0 : index
    %11 = vector.load %arg5[%c0_8, %c0_9, %c0_10] : memref<2x8x32xf32, #tpu.memory_space<vmem>>, vector<1x8x32xf32>
    %12 = vector.shape_cast %11 : vector<1x8x32xf32> to vector<8x32xf32>
    %c0_11 = arith.constant 0 : index
    %c0_12 = arith.constant 0 : index
    %c0_13 = arith.constant 0 : index
    %13 = vector.load %arg3[%c0_11, %c0_12, %c0_13] : memref<2x8x1xf32, #tpu.memory_space<vmem>>, vector<1x8x1xf32>
    %14 = vector.shape_cast %13 : vector<1x8x1xf32> to vector<8x1xf32>
    %15 = vector.broadcast %14 : vector<8x1xf32> to vector<8x32xf32>
    %16 = arith.mulf %15, %10 : vector<8x32xf32>
    %17 = arith.addf %12, %16 : vector<8x32xf32>
    %c0_14 = arith.constant 0 : index
    %c0_15 = arith.constant 0 : index
    %c0_16 = arith.constant 0 : index
    %18 = vector.load %arg5[%c0_14, %c0_15, %c0_16] : memref<2x8x32xf32, #tpu.memory_space<vmem>>, vector<1x8x32xf32>
    %19 = vector.shape_cast %18 : vector<1x8x32xf32> to vector<8x32xf32>
    %20 = vector.shape_cast %17 : vector<8x32xf32> to vector<1x8x32xf32>
    tpu.vector_store %arg5[%c0_14, %c0_15, %c0_16], %20 {strides = array<i32>} : memref<2x8x32xf32, #tpu.memory_space<vmem>>, vector<1x8x32xf32>,
    %21 = vector.extract_strided_slice %5 {offsets = [0, 32], sizes = [16, 32], strides = [1, 1]} : vector<16x64xf32> to vector<16x32xf32>
    %c1 = arith.constant 1 : index
    %c0_17 = arith.constant 0 : index
    %c0_18 = arith.constant 0 : index
    %22 = vector.load %arg2[%c1, %c0_17, %c0_18] : memref<2x16x8xbf16, #tpu.memory_space<vmem>>, vector<1x16x8xbf16>
    %23 = vector.shape_cast %22 : vector<1x16x8xbf16> to vector<16x8xbf16>
    %24 = arith.extf %23 : vector<16x8xbf16> to vector<16x8xf32>
    %cst_19 = arith.constant dense<0.000000e+00> : vector<8x32xf32>
    %25 = tpu.matmul %24, %21, %cst_19 {dimension_numbers = #tpu.dot_dimension_numbers<[0], [0], [1], [1], [0, 1, 1, 1], [], []>} : vector<16x8xf32>, vector<16x32xf32>, vector<8x32xf32> -> vector<8x32xf32>
    %c1_20 = arith.constant 1 : index
    %c0_21 = arith.constant 0 : index
    %c0_22 = arith.constant 0 : index
    %26 = vector.load %arg5[%c1_20, %c0_21, %c0_22] : memref<2x8x32xf32, #tpu.memory_space<vmem>>, vector<1x8x32xf32>
    %27 = vector.shape_cast %26 : vector<1x8x32xf32> to vector<8x32xf32>
    %c1_23 = arith.constant 1 : index
    %c0_24 = arith.constant 0 : index
    %c0_25 = arith.constant 0 : index
    %28 = vector.load %arg3[%c1_23, %c0_24, %c0_25] : memref<2x8x1xf32, #tpu.memory_space<vmem>>, vector<1x8x1xf32>
    %29 = vector.shape_cast %28 : vector<1x8x1xf32> to vector<8x1xf32>
    %30 = vector.broadcast %29 : vector<8x1xf32> to vector<8x32xf32>
    %31 = arith.mulf %30, %25 : vector<8x32xf32>
    %32 = arith.addf %27, %31 : vector<8x32xf32>
    %c1_26 = arith.constant 1 : index
    %c0_27 = arith.constant 0 : index
    %c0_28 = arith.constant 0 : index
    %33 = vector.load %arg5[%c1_26, %c0_27, %c0_28] : memref<2x8x32xf32, #tpu.memory_space<vmem>>, vector<1x8x32xf32>
    %34 = vector.shape_cast %33 : vector<1x8x32xf32> to vector<8x32xf32>
    %35 = vector.shape_cast %32 : vector<8x32xf32> to vector<1x8x32xf32>
    tpu.vector_store %arg5[%c1_26, %c0_27, %c0_28], %35 {strides = array<i32>} : memref<2x8x32xf32, #tpu.memory_space<vmem>>, vector<1x8x32xf32>,
    return
  }
  func.func @transform_0(%arg0: i32) -> (i32, i32) {
    %c0_i32 = arith.constant 0 : i32
    %c0_i32_0 = arith.constant 0 : i32
    return %arg0, %c0_i32 : i32, i32
  }
  func.func @transform_1(%arg0: i32) -> (i32, i32, i32) {
    %c0_i32 = arith.constant 0 : i32
    %c0_i32_0 = arith.constant 0 : i32
    %c0_i32_1 = arith.constant 0 : i32
    return %c0_i32, %arg0, %c0_i32_0 : i32, i32, i32
  }
  func.func @transform_2(%arg0: i32) -> (i32, i32, i32) {
    %c0_i32 = arith.constant 0 : i32
    %c0_i32_0 = arith.constant 0 : i32
    %c0_i32_1 = arith.constant 0 : i32
    %c0_i32_2 = arith.constant 0 : i32
    return %c0_i32, %c0_i32_0, %c0_i32_1 : i32, i32, i32
  }
  func.func @transform_3(%arg0: i32) -> (i32, i32) {
    %c0_i32 = arith.constant 0 : i32
    %c0_i32_0 = arith.constant 0 : i32
    %c0_i32_1 = arith.constant 0 : i32
    return %c0_i32, %c0_i32_0 : i32, i32
  }
  func.func @transform_4(%arg0: i32) -> (i32, i32, i32) {
    %c0_i32 = arith.constant 0 : i32
    %c0_i32_0 = arith.constant 0 : i32
    %c0_i32_1 = arith.constant 0 : i32
    %c0_i32_2 = arith.constant 0 : i32
    return %c0_i32, %c0_i32_0, %c0_i32_1 : i32, i32, i32
  }
}

module attributes {stable_mosaic.version = 11 : i64} {
  func.func @node_update_kernel(%arg0: i32, %arg1: memref<2x16x8xbf16, #tpu.memory_space<vmem>>, %arg2: memref<2x16x1xf32, #tpu.memory_space<vmem>>, %arg3: memref<2x8x32xf32, #tpu.memory_space<vmem>>, %arg4: memref<2x1x32xf32, #tpu.memory_space<vmem>>, %arg5: memref<2x32x32xf32, #tpu.memory_space<vmem>>, %arg6: memref<1x32xf32, #tpu.memory_space<vmem>>, %arg7: memref<32x96xf32, #tpu.memory_space<vmem>>, %arg8: memref<1x96xf32, #tpu.memory_space<vmem>>, %arg9: memref<32x96xf32, #tpu.memory_space<vmem>>, %arg10: memref<1x96xf32, #tpu.memory_space<vmem>>, %arg11: memref<16x32xf32, #tpu.memory_space<vmem>>, %arg12: memref<32x32xf32, #tpu.memory_space<vmem>>, %arg13: memref<1x32xf32, #tpu.memory_space<vmem>>, %arg14: memref<16x32xf32, #tpu.memory_space<vmem>>, %arg15: memref<16x32xf32, #tpu.memory_space<vmem>>) attributes {dimension_semantics = [#tpu.dimension_semantics<parallel>], iteration_bounds = array<i64: 2>, scalar_prefetch = 0 : i64, scratch_operands = 0 : i64, tpu.core_type = #tpu.core_type<tc>, window_params = [{transform_indices = @transform_0, window_bounds = array<i64: 2, 16, 8>}, {transform_indices = @transform_1, window_bounds = array<i64: 2, 16, 1>}, {pipeline_mode = #tpu.pipeline_mode<synchronous>, transform_indices = @transform_2, window_bounds = array<i64: 2, 8, 32>}, {pipeline_mode = #tpu.pipeline_mode<synchronous>, transform_indices = @transform_3, window_bounds = array<i64: 2, 1, 32>}, {pipeline_mode = #tpu.pipeline_mode<synchronous>, transform_indices = @transform_4, window_bounds = array<i64: 2, 32, 32>}, {pipeline_mode = #tpu.pipeline_mode<synchronous>, transform_indices = @transform_5, window_bounds = array<i64: 1, 32>}, {pipeline_mode = #tpu.pipeline_mode<synchronous>, transform_indices = @transform_6, window_bounds = array<i64: 32, 96>}, {pipeline_mode = #tpu.pipeline_mode<synchronous>, transform_indices = @transform_7, window_bounds = array<i64: 1, 96>}, {pipeline_mode = #tpu.pipeline_mode<synchronous>, transform_indices = @transform_8, window_bounds = array<i64: 32, 96>}, {pipeline_mode = #tpu.pipeline_mode<synchronous>, transform_indices = @transform_9, window_bounds = array<i64: 1, 96>}, {transform_indices = @transform_10, window_bounds = array<i64: 16, 32>}, {pipeline_mode = #tpu.pipeline_mode<synchronous>, transform_indices = @transform_11, window_bounds = array<i64: 32, 32>}, {pipeline_mode = #tpu.pipeline_mode<synchronous>, transform_indices = @transform_12, window_bounds = array<i64: 1, 32>}, {transform_indices = @transform_13, window_bounds = array<i64: 16, 32>}, {transform_indices = @transform_14, window_bounds = array<i64: 16, 32>}]} {
    %c0 = arith.constant 0 : index
    %c0_0 = arith.constant 0 : index
    %c0_1 = arith.constant 0 : index
    %0 = vector.load %arg3[%c0, %c0_0, %c0_1] : memref<2x8x32xf32, #tpu.memory_space<vmem>>, vector<2x8x32xf32>
    %1 = arith.truncf %0 : vector<2x8x32xf32> to vector<2x8x32xbf16>
    %cst = arith.constant 0.000000e+00 : f32
    %2 = vector.broadcast %cst : f32 to vector<16x32xf32>
    %c0_2 = arith.constant 0 : index
    %c0_3 = arith.constant 0 : index
    %c0_4 = arith.constant 0 : index
    %3 = vector.load %arg1[%c0_2, %c0_3, %c0_4] : memref<2x16x8xbf16, #tpu.memory_space<vmem>>, vector<1x16x8xbf16>
    %4 = vector.shape_cast %3 : vector<1x16x8xbf16> to vector<16x8xbf16>
    %5 = vector.extract_strided_slice %1 {offsets = [0, 0, 0], sizes = [1, 8, 32], strides = [1, 1, 1]} : vector<2x8x32xbf16> to vector<1x8x32xbf16>
    %6 = vector.shape_cast %5 : vector<1x8x32xbf16> to vector<8x32xbf16>
    %cst_5 = arith.constant dense<0.000000e+00> : vector<16x32xf32>
    %7 = tpu.matmul %4, %6, %cst_5 {dimension_numbers = #tpu.dot_dimension_numbers<[1], [0], [0], [1], [0, 0, 1, 1], [], []>} : vector<16x8xbf16>, vector<8x32xbf16>, vector<16x32xf32> -> vector<16x32xf32>
    %c0_6 = arith.constant 0 : index
    %c0_7 = arith.constant 0 : index
    %c0_8 = arith.constant 0 : index
    %8 = vector.load %arg2[%c0_6, %c0_7, %c0_8] : memref<2x16x1xf32, #tpu.memory_space<vmem>>, vector<1x16x1xf32>
    %9 = vector.shape_cast %8 : vector<1x16x1xf32> to vector<16x1xf32>
    %10 = vector.broadcast %9 : vector<16x1xf32> to vector<16x32xf32>
    %11 = arith.mulf %7, %10 : vector<16x32xf32>
    %c0_9 = arith.constant 0 : index
    %c0_10 = arith.constant 0 : index
    %c0_11 = arith.constant 0 : index
    %12 = vector.load %arg4[%c0_9, %c0_10, %c0_11] : memref<2x1x32xf32, #tpu.memory_space<vmem>>, vector<1x1x32xf32>
    %13 = vector.shape_cast %12 : vector<1x1x32xf32> to vector<1x32xf32>
    %14 = vector.broadcast %13 : vector<1x32xf32> to vector<16x32xf32>
    %15 = arith.addf %11, %14 : vector<16x32xf32>
    %c0_12 = arith.constant 0 : index
    %c0_13 = arith.constant 0 : index
    %c0_14 = arith.constant 0 : index
    %16 = vector.load %arg5[%c0_12, %c0_13, %c0_14] : memref<2x32x32xf32, #tpu.memory_space<vmem>>, vector<1x32x32xf32>
    %17 = vector.shape_cast %16 : vector<1x32x32xf32> to vector<32x32xf32>
    %cst_15 = arith.constant dense<0.000000e+00> : vector<16x32xf32>
    %18 = tpu.matmul %15, %17, %cst_15 {dimension_numbers = #tpu.dot_dimension_numbers<[1], [0], [0], [1], [0, 0, 1, 1], [], []>} : vector<16x32xf32>, vector<32x32xf32>, vector<16x32xf32> -> vector<16x32xf32>
    %19 = arith.addf %2, %18 : vector<16x32xf32>
    %c1 = arith.constant 1 : index
    %c0_16 = arith.constant 0 : index
    %c0_17 = arith.constant 0 : index
    %20 = vector.load %arg1[%c1, %c0_16, %c0_17] : memref<2x16x8xbf16, #tpu.memory_space<vmem>>, vector<1x16x8xbf16>
    %21 = vector.shape_cast %20 : vector<1x16x8xbf16> to vector<16x8xbf16>
    %22 = vector.extract_strided_slice %1 {offsets = [1, 0, 0], sizes = [1, 8, 32], strides = [1, 1, 1]} : vector<2x8x32xbf16> to vector<1x8x32xbf16>
    %23 = vector.shape_cast %22 : vector<1x8x32xbf16> to vector<8x32xbf16>
    %cst_18 = arith.constant dense<0.000000e+00> : vector<16x32xf32>
    %24 = tpu.matmul %21, %23, %cst_18 {dimension_numbers = #tpu.dot_dimension_numbers<[1], [0], [0], [1], [0, 0, 1, 1], [], []>} : vector<16x8xbf16>, vector<8x32xbf16>, vector<16x32xf32> -> vector<16x32xf32>
    %c1_19 = arith.constant 1 : index
    %c0_20 = arith.constant 0 : index
    %c0_21 = arith.constant 0 : index
    %25 = vector.load %arg2[%c1_19, %c0_20, %c0_21] : memref<2x16x1xf32, #tpu.memory_space<vmem>>, vector<1x16x1xf32>
    %26 = vector.shape_cast %25 : vector<1x16x1xf32> to vector<16x1xf32>
    %27 = vector.broadcast %26 : vector<16x1xf32> to vector<16x32xf32>
    %28 = arith.mulf %24, %27 : vector<16x32xf32>
    %c1_22 = arith.constant 1 : index
    %c0_23 = arith.constant 0 : index
    %c0_24 = arith.constant 0 : index
    %29 = vector.load %arg4[%c1_22, %c0_23, %c0_24] : memref<2x1x32xf32, #tpu.memory_space<vmem>>, vector<1x1x32xf32>
    %30 = vector.shape_cast %29 : vector<1x1x32xf32> to vector<1x32xf32>
    %31 = vector.broadcast %30 : vector<1x32xf32> to vector<16x32xf32>
    %32 = arith.addf %28, %31 : vector<16x32xf32>
    %c1_25 = arith.constant 1 : index
    %c0_26 = arith.constant 0 : index
    %c0_27 = arith.constant 0 : index
    %33 = vector.load %arg5[%c1_25, %c0_26, %c0_27] : memref<2x32x32xf32, #tpu.memory_space<vmem>>, vector<1x32x32xf32>
    %34 = vector.shape_cast %33 : vector<1x32x32xf32> to vector<32x32xf32>
    %cst_28 = arith.constant dense<0.000000e+00> : vector<16x32xf32>
    %35 = tpu.matmul %32, %34, %cst_28 {dimension_numbers = #tpu.dot_dimension_numbers<[1], [0], [0], [1], [0, 0, 1, 1], [], []>} : vector<16x32xf32>, vector<32x32xf32>, vector<16x32xf32> -> vector<16x32xf32>
    %36 = arith.addf %19, %35 : vector<16x32xf32>
    %c0_29 = arith.constant 0 : index
    %c0_30 = arith.constant 0 : index
    %37 = vector.load %arg6[%c0_29, %c0_30] : memref<1x32xf32, #tpu.memory_space<vmem>>, vector<1x32xf32>
    %38 = vector.broadcast %37 : vector<1x32xf32> to vector<16x32xf32>
    %39 = arith.addf %36, %38 : vector<16x32xf32>
    %cst_31 = arith.constant 0.000000e+00 : f32
    %40 = vector.broadcast %cst_31 : f32 to vector<16x32xf32>
    %41 = arith.maximumf %39, %40 : vector<16x32xf32>
    %c0_32 = arith.constant 0 : index
    %c0_33 = arith.constant 0 : index
    %42 = vector.load %arg11[%c0_32, %c0_33] : memref<16x32xf32, #tpu.memory_space<vmem>>, vector<16x32xf32>
    %c0_34 = arith.constant 0 : index
    %c0_35 = arith.constant 0 : index
    %43 = vector.load %arg7[%c0_34, %c0_35] : memref<32x96xf32, #tpu.memory_space<vmem>>, vector<32x96xf32>
    %cst_36 = arith.constant dense<0.000000e+00> : vector<16x96xf32>
    %44 = tpu.matmul %41, %43, %cst_36 {dimension_numbers = #tpu.dot_dimension_numbers<[1], [0], [0], [1], [0, 0, 1, 1], [], []>} : vector<16x32xf32>, vector<32x96xf32>, vector<16x96xf32> -> vector<16x96xf32>
    %c0_37 = arith.constant 0 : index
    %c0_38 = arith.constant 0 : index
    %45 = vector.load %arg8[%c0_37, %c0_38] : memref<1x96xf32, #tpu.memory_space<vmem>>, vector<1x96xf32>
    %46 = vector.broadcast %45 : vector<1x96xf32> to vector<16x96xf32>
    %47 = arith.addf %44, %46 : vector<16x96xf32>
    %c0_39 = arith.constant 0 : index
    %c0_40 = arith.constant 0 : index
    %48 = vector.load %arg9[%c0_39, %c0_40] : memref<32x96xf32, #tpu.memory_space<vmem>>, vector<32x96xf32>
    %cst_41 = arith.constant dense<0.000000e+00> : vector<16x96xf32>
    %49 = tpu.matmul %42, %48, %cst_41 {dimension_numbers = #tpu.dot_dimension_numbers<[1], [0], [0], [1], [0, 0, 1, 1], [], []>} : vector<16x32xf32>, vector<32x96xf32>, vector<16x96xf32> -> vector<16x96xf32>
    %c0_42 = arith.constant 0 : index
    %c0_43 = arith.constant 0 : index
    %50 = vector.load %arg10[%c0_42, %c0_43] : memref<1x96xf32, #tpu.memory_space<vmem>>, vector<1x96xf32>
    %51 = vector.broadcast %50 : vector<1x96xf32> to vector<16x96xf32>
    %52 = arith.addf %49, %51 : vector<16x96xf32>
    %53 = vector.extract_strided_slice %47 {offsets = [0, 0], sizes = [16, 32], strides = [1, 1]} : vector<16x96xf32> to vector<16x32xf32>
    %54 = vector.extract_strided_slice %52 {offsets = [0, 0], sizes = [16, 32], strides = [1, 1]} : vector<16x96xf32> to vector<16x32xf32>
    %55 = arith.addf %53, %54 : vector<16x32xf32>
    %56 = arith.negf %55 : vector<16x32xf32>
    %57 = math.exp %56 : vector<16x32xf32>
    %cst_44 = arith.constant 1.000000e+00 : f32
    %58 = vector.broadcast %cst_44 : f32 to vector<16x32xf32>
    %59 = arith.addf %58, %57 : vector<16x32xf32>
    %60 = arith.divf %58, %59 : vector<16x32xf32>
    %61 = vector.extract_strided_slice %47 {offsets = [0, 32], sizes = [16, 32], strides = [1, 1]} : vector<16x96xf32> to vector<16x32xf32>
    %62 = vector.extract_strided_slice %52 {offsets = [0, 32], sizes = [16, 32], strides = [1, 1]} : vector<16x96xf32> to vector<16x32xf32>
    %63 = arith.addf %61, %62 : vector<16x32xf32>
    %64 = arith.negf %63 : vector<16x32xf32>
    %65 = math.exp %64 : vector<16x32xf32>
    %cst_45 = arith.constant 1.000000e+00 : f32
    %66 = vector.broadcast %cst_45 : f32 to vector<16x32xf32>
    %67 = arith.addf %66, %65 : vector<16x32xf32>
    %68 = arith.divf %66, %67 : vector<16x32xf32>
    %69 = vector.extract_strided_slice %47 {offsets = [0, 64], sizes = [16, 32], strides = [1, 1]} : vector<16x96xf32> to vector<16x32xf32>
    %70 = vector.extract_strided_slice %52 {offsets = [0, 64], sizes = [16, 32], strides = [1, 1]} : vector<16x96xf32> to vector<16x32xf32>
    %71 = arith.mulf %60, %70 : vector<16x32xf32>
    %72 = arith.addf %69, %71 : vector<16x32xf32>
    %73 = math.tanh %72 : vector<16x32xf32>
    %cst_46 = arith.constant 1.000000e+00 : f32
    %74 = vector.broadcast %cst_46 : f32 to vector<16x32xf32>
    %75 = arith.subf %74, %68 : vector<16x32xf32>
    %76 = arith.mulf %75, %73 : vector<16x32xf32>
    %77 = arith.mulf %68, %42 : vector<16x32xf32>
    %78 = arith.addf %76, %77 : vector<16x32xf32>
    %c0_47 = arith.constant 0 : index
    %c0_48 = arith.constant 0 : index
    %79 = vector.load %arg14[%c0_47, %c0_48] : memref<16x32xf32, #tpu.memory_space<vmem>>, vector<16x32xf32>
    tpu.vector_store %arg14[%c0_47, %c0_48], %78 {strides = array<i32>} : memref<16x32xf32, #tpu.memory_space<vmem>>, vector<16x32xf32>,
    %c0_49 = arith.constant 0 : index
    %c0_50 = arith.constant 0 : index
    %80 = vector.load %arg12[%c0_49, %c0_50] : memref<32x32xf32, #tpu.memory_space<vmem>>, vector<32x32xf32>
    %cst_51 = arith.constant dense<0.000000e+00> : vector<16x32xf32>
    %81 = tpu.matmul %78, %80, %cst_51 {dimension_numbers = #tpu.dot_dimension_numbers<[1], [0], [0], [1], [0, 0, 1, 1], [], []>} : vector<16x32xf32>, vector<32x32xf32>, vector<16x32xf32> -> vector<16x32xf32>
    %c0_52 = arith.constant 0 : index
    %c0_53 = arith.constant 0 : index
    %82 = vector.load %arg13[%c0_52, %c0_53] : memref<1x32xf32, #tpu.memory_space<vmem>>, vector<1x32xf32>
    %83 = vector.broadcast %82 : vector<1x32xf32> to vector<16x32xf32>
    %84 = arith.addf %81, %83 : vector<16x32xf32>
    %c0_54 = arith.constant 0 : index
    %c0_55 = arith.constant 0 : index
    %85 = vector.load %arg15[%c0_54, %c0_55] : memref<16x32xf32, #tpu.memory_space<vmem>>, vector<16x32xf32>
    tpu.vector_store %arg15[%c0_54, %c0_55], %84 {strides = array<i32>} : memref<16x32xf32, #tpu.memory_space<vmem>>, vector<16x32xf32>,
    return
  }
  func.func @transform_0(%arg0: i32) -> (i32, i32, i32) {
    %c0_i32 = arith.constant 0 : i32
    %c0_i32_0 = arith.constant 0 : i32
    %c0_i32_1 = arith.constant 0 : i32
    return %c0_i32, %arg0, %c0_i32_0 : i32, i32, i32
  }
  func.func @transform_1(%arg0: i32) -> (i32, i32, i32) {
    %c0_i32 = arith.constant 0 : i32
    %c0_i32_0 = arith.constant 0 : i32
    %c0_i32_1 = arith.constant 0 : i32
    return %c0_i32, %arg0, %c0_i32_0 : i32, i32, i32
  }
  func.func @transform_2(%arg0: i32) -> (i32, i32, i32) {
    %c0_i32 = arith.constant 0 : i32
    %c0_i32_0 = arith.constant 0 : i32
    %c0_i32_1 = arith.constant 0 : i32
    %c0_i32_2 = arith.constant 0 : i32
    return %c0_i32, %c0_i32_0, %c0_i32_1 : i32, i32, i32
  }
  func.func @transform_3(%arg0: i32) -> (i32, i32, i32) {
    %c0_i32 = arith.constant 0 : i32
    %c0_i32_0 = arith.constant 0 : i32
    %c0_i32_1 = arith.constant 0 : i32
    %c0_i32_2 = arith.constant 0 : i32
    return %c0_i32, %c0_i32_0, %c0_i32_1 : i32, i32, i32
  }
  func.func @transform_4(%arg0: i32) -> (i32, i32, i32) {
    %c0_i32 = arith.constant 0 : i32
    %c0_i32_0 = arith.constant 0 : i32
    %c0_i32_1 = arith.constant 0 : i32
    %c0_i32_2 = arith.constant 0 : i32
    return %c0_i32, %c0_i32_0, %c0_i32_1 : i32, i32, i32
  }
  func.func @transform_5(%arg0: i32) -> (i32, i32) {
    %c0_i32 = arith.constant 0 : i32
    %c0_i32_0 = arith.constant 0 : i32
    %c0_i32_1 = arith.constant 0 : i32
    return %c0_i32, %c0_i32_0 : i32, i32
  }
  func.func @transform_6(%arg0: i32) -> (i32, i32) {
    %c0_i32 = arith.constant 0 : i32
    %c0_i32_0 = arith.constant 0 : i32
    %c0_i32_1 = arith.constant 0 : i32
    return %c0_i32, %c0_i32_0 : i32, i32
  }
  func.func @transform_7(%arg0: i32) -> (i32, i32) {
    %c0_i32 = arith.constant 0 : i32
    %c0_i32_0 = arith.constant 0 : i32
    %c0_i32_1 = arith.constant 0 : i32
    return %c0_i32, %c0_i32_0 : i32, i32
  }
  func.func @transform_8(%arg0: i32) -> (i32, i32) {
    %c0_i32 = arith.constant 0 : i32
    %c0_i32_0 = arith.constant 0 : i32
    %c0_i32_1 = arith.constant 0 : i32
    return %c0_i32, %c0_i32_0 : i32, i32
  }
  func.func @transform_9(%arg0: i32) -> (i32, i32) {
    %c0_i32 = arith.constant 0 : i32
    %c0_i32_0 = arith.constant 0 : i32
    %c0_i32_1 = arith.constant 0 : i32
    return %c0_i32, %c0_i32_0 : i32, i32
  }
  func.func @transform_10(%arg0: i32) -> (i32, i32) {
    %c0_i32 = arith.constant 0 : i32
    %c0_i32_0 = arith.constant 0 : i32
    return %arg0, %c0_i32 : i32, i32
  }
  func.func @transform_11(%arg0: i32) -> (i32, i32) {
    %c0_i32 = arith.constant 0 : i32
    %c0_i32_0 = arith.constant 0 : i32
    %c0_i32_1 = arith.constant 0 : i32
    return %c0_i32, %c0_i32_0 : i32, i32
  }
  func.func @transform_12(%arg0: i32) -> (i32, i32) {
    %c0_i32 = arith.constant 0 : i32
    %c0_i32_0 = arith.constant 0 : i32
    %c0_i32_1 = arith.constant 0 : i32
    return %c0_i32, %c0_i32_0 : i32, i32
  }
  func.func @transform_13(%arg0: i32) -> (i32, i32) {
    %c0_i32 = arith.constant 0 : i32
    %c0_i32_0 = arith.constant 0 : i32
    return %arg0, %c0_i32 : i32, i32
  }
  func.func @transform_14(%arg0: i32) -> (i32, i32) {
    %c0_i32 = arith.constant 0 : i32
    %c0_i32_0 = arith.constant 0 : i32
    return %arg0, %c0_i32 : i32, i32
  }
}

</mosaic_0001>

<llo_original>
// kernel: dyn_growing_hnn_forward.2
$region0: #{dyn_growing_hnn_forward.2}
  #allocation0 [shape = 'u32[]', space=smem, size = 0x4, offset = 0x4, fixed_abs, tag = 'smem constant byte address 0x4 - core index']
  #allocation1 [shape = 'u32[144,128]{1,0:T(1,128)}', space=vmem, size = 0x12000, scoped, tag = 'internal scratch']
  %s0 = inlined_call_operand.vmem [shape: f32[32,4], index: 0, kind: input, shape index: {}]
  %s1 = inlined_call_operand.vmem [shape: bf16[2,32,8], index: 1, kind: input, shape index: {}]
  %s2 = inlined_call_operand.vmem [shape: f32[2,8,1], index: 2, kind: input, shape index: {}]
  %s3 = inlined_call_operand.vmem [shape: f32[4,64], index: 3, kind: input, shape index: {}]
  %s4 = inlined_call_operand.vmem [shape: f32[2,8,32], index: 4, kind: output, shape index: {}]
  %s5 = sld [smem:[#allocation0]]
  $region94: #{dyn_growing_hnn_forward.2} parent=0
    _
  %s7 = ssub.s32 1, %s5
  %s8 = scalar_select 0, %s7, %s5
  $region1: #{dyn_growing_hnn_forward.2} parent=0
    #allocation2 [shape = 'u8[16384]{0}', space=vmem, size = 0x4000, scoped, tag = 'input window, operand 1']
    loop: start=0, step=1, limit=4
    $region2: #{dyn_growing_hnn_forward.2} parent=1 // loop_pre_header
      _
    $region3: #{dyn_growing_hnn_forward.2} parent=1 // loop_header
      %s10 = sphi 0, %s14
      %p11 = scmp.ge.s32.totalorder %s10, 4
      %s20 = sphi 0, %s22
      %s23 = sphi 0, %s20
      %s24 = sphi 0, %s23
      %s40 = sphi 0, %s24
      %s46 = sphi 0, %s48
      %s49 = sphi 0, %s46
      %s50 = sphi 0, %s49
      %s66 = sphi 0, %s50
      %s70 = sphi 0, %s70
      %s72 = sphi 0, %s70
      %s73 = sphi 0, %s72
      %s87 = sphi 0, %s73
      %s91 = sphi 0, %s91
      %s93 = sphi 0, %s91
      %s94 = sphi 0, %s93
      %s108 = sphi 0, %s94
      %s112 = sphi 0, %s112
      %s114 = sphi 0, %s112
      %s115 = sphi 0, %s114
      %s129 = sphi 0, %s115
    $region4: #{dyn_growing_hnn_forward.2} parent=1 // loop_header_branch
      %13 = sbr.rel (%p11) target = $region8
    $region5: #{dyn_growing_hnn_forward.2} parent=1 // loop_body
      %s15 = ssub.s32 %s10, 1
      %s16 = ssub.s32 %s10, 2
      %s17 = sadd.s32 %s10, 1
      %s18 = ssub.s32 %s10, %s17
      %p19 = scmp.eq.s32.totalorder %s18, 0
      %s21 = sadd.s32 %s20, 1
      %s22 = scalar_select %p19, %s20, %s21
      %p25 = pneg %p19
      %p26 = scmp.eq.s32.totalorder %s10, 1
      %p27 = por %p25, %p26
      %p28 = scmp.ne.s32.totalorder %s20, %s23
      %p29 = scmp.eq.s32.totalorder %s10, 0
      %p30 = por %p28, %p29
      %p31 = scmp.ne.s32.totalorder %s20, %s23
      %p32 = scmp.eq.s32.totalorder %s15, 1
      %p33 = por %p31, %p32
      %p34 = scmp.ne.s32.totalorder %s23, %s24
      %p35 = scmp.eq.s32.totalorder %s15, 0
      %p36 = por %p34, %p35
      %p37 = scmp.ne.s32.totalorder %s23, %s24
      %p38 = scmp.eq.s32.totalorder %s16, 1
      %p39 = por %p37, %p38
      %p41 = scmp.ne.s32.totalorder %s24, %s40
      %p42 = scmp.eq.s32.totalorder %s16, 0
      %p43 = por %p41, %p42
      %s44 = ssub.s32 %s10, %s17
      %p45 = scmp.eq.s32.totalorder %s44, 0
      %s47 = sadd.s32 %s46, 1
      %s48 = scalar_select %p45, %s46, %s47
      %p51 = pneg %p45
      %p52 = scmp.eq.s32.totalorder %s10, 1
      %p53 = por %p51, %p52
      %p54 = scmp.ne.s32.totalorder %s46, %s49
      %p55 = scmp.eq.s32.totalorder %s10, 0
      %p56 = por %p54, %p55
      %p57 = scmp.ne.s32.totalorder %s46, %s49
      %p58 = scmp.eq.s32.totalorder %s15, 1
      %p59 = por %p57, %p58
      %p60 = scmp.ne.s32.totalorder %s49, %s50
      %p61 = scmp.eq.s32.totalorder %s15, 0
      %p62 = por %p60, %p61
      %p63 = scmp.ne.s32.totalorder %s49, %s50
      %p64 = scmp.eq.s32.totalorder %s16, 1
      %p65 = por %p63, %p64
      %p67 = scmp.ne.s32.totalorder %s50, %s66
      %p68 = scmp.eq.s32.totalorder %s16, 0
      %p69 = por %p67, %p68
      %s71 = sadd.s32 %s70, 1
      %p74 = scmp.eq.s32.totalorder %s10, 1
      %p75 = scmp.ne.s32.totalorder %s70, %s72
      %p76 = scmp.eq.s32.totalorder %s10, 0
      %p77 = por %p75, %p76
      %p78 = scmp.ne.s32.totalorder %s70, %s72
      %p79 = scmp.eq.s32.totalorder %s15, 1
      %p80 = por %p78, %p79
      %p81 = scmp.ne.s32.totalorder %s72, %s73
      %p82 = scmp.eq.s32.totalorder %s15, 0
      %p83 = por %p81, %p82
      %p84 = scmp.ne.s32.totalorder %s72, %s73
      %p85 = scmp.eq.s32.totalorder %s16, 1
      %p86 = por %p84, %p85
      %p88 = scmp.ne.s32.totalorder %s73, %s87
      %p89 = scmp.eq.s32.totalorder %s16, 0
      %p90 = por %p88, %p89
      %s92 = sadd.s32 %s91, 1
      %p95 = scmp.eq.s32.totalorder %s10, 1
      %p96 = scmp.ne.s32.totalorder %s91, %s93
      %p97 = scmp.eq.s32.totalorder %s10, 0
      %p98 = por %p96, %p97
      %p99 = scmp.ne.s32.totalorder %s91, %s93
      %p100 = scmp.eq.s32.totalorder %s15, 1
      %p101 = por %p99, %p100
      %p102 = scmp.ne.s32.totalorder %s93, %s94
      %p103 = scmp.eq.s32.totalorder %s15, 0
      %p104 = por %p102, %p103
      %p105 = scmp.ne.s32.totalorder %s93, %s94
      %p106 = scmp.eq.s32.totalorder %s16, 1
      %p107 = por %p105, %p106
      %p109 = scmp.ne.s32.totalorder %s94, %s108
      %p110 = scmp.eq.s32.totalorder %s16, 0
      %p111 = por %p109, %p110
      %s113 = sadd.s32 %s112, 1
      %p116 = scmp.eq.s32.totalorder %s10, 1
      %p117 = scmp.ne.s32.totalorder %s112, %s114
      %p118 = scmp.eq.s32.totalorder %s10, 0
      %p119 = por %p117, %p118
      %p120 = scmp.ne.s32.totalorder %s112, %s114
      %p121 = scmp.eq.s32.totalorder %s15, 1
      %p122 = por %p120, %p121
      %p123 = scmp.ne.s32.totalorder %s114, %s115
      %p124 = scmp.eq.s32.totalorder %s15, 0
      %p125 = por %p123, %p124
      %p126 = scmp.ne.s32.totalorder %s114, %s115
      %p127 = scmp.eq.s32.totalorder %s16, 1
      %p128 = por %p126, %p127
      %p130 = scmp.ne.s32.totalorder %s115, %s129
      %p131 = scmp.eq.s32.totalorder %s16, 0
      %p132 = por %p130, %p131
      %p133 = scmp.le.s32.totalorder 1, %s10
      %p134 = scmp.lt.s32.totalorder %s10, 3
      %p135 = pnand %p133, %p134
      %p136 = pneg %p135
      // Predicated region
      $region9: #{dyn_growing_hnn_forward.2} parent=5 // pred_check
        _
      $region10: #{dyn_growing_hnn_forward.2} parent=5 // pred_check_branch
        %138 = sbr.rel (%p135) target = $region12
      $region11: #{dyn_growing_hnn_forward.2} parent=5 // pred_region
        %s139 = ssub.s32 %s10, 1
        // Predicated region
        $region13: #{dyn_growing_hnn_forward.2} parent=11 // pred_check
          %p140 = pneg %p83
        $region14: #{dyn_growing_hnn_forward.2} parent=11 // pred_check_branch
          %142 = sbr.rel (%p140) target = $region16
        $region15: #{dyn_growing_hnn_forward.2} parent=11 // pred_region
          _
        $region16: #{dyn_growing_hnn_forward.2} parent=11 // pred_fallthru
          _
        // Predicated region
        $region17: #{dyn_growing_hnn_forward.2} parent=11 // pred_check
          %p143 = pneg %p104
        $region18: #{dyn_growing_hnn_forward.2} parent=11 // pred_check_branch
          %145 = sbr.rel (%p143) target = $region20
        $region19: #{dyn_growing_hnn_forward.2} parent=11 // pred_region
          _
        $region20: #{dyn_growing_hnn_forward.2} parent=11 // pred_fallthru
          _
      $region12: #{dyn_growing_hnn_forward.2} parent=5 // pred_fallthru
        _
      %p146 = scmp.lt.s32.totalorder %s10, 2
      // Predicated region
      $region21: #{dyn_growing_hnn_forward.2} parent=5 // pred_check
        %p147 = pneg %p146
      $region22: #{dyn_growing_hnn_forward.2} parent=5 // pred_check_branch
        %149 = sbr.rel (%p147) target = $region24
      $region23: #{dyn_growing_hnn_forward.2} parent=5 // pred_region
        // Predicated region
        $region25: #{dyn_growing_hnn_forward.2} parent=23 // pred_check
          %p150 = pneg %p30
        $region26: #{dyn_growing_hnn_forward.2} parent=23 // pred_check_branch
          %152 = sbr.rel (%p150) target = $region28
        $region27: #{dyn_growing_hnn_forward.2} parent=23 // pred_region
          %s153 = smul.u32 2, %s10
          %p154 = scmp.lt.s32.totalorder %s153, 3
          %s155 = scalar_select %p154, %s153, 3
          %s156 = smul.addr %s155, 8
          %s157 = scalar_lea.vmem %s0, %s156
          %s158 = smul.u32 2, %s10
        $region28: #{dyn_growing_hnn_forward.2} parent=23 // pred_fallthru
          _
        // Predicated region
        $region29: #{dyn_growing_hnn_forward.2} parent=23 // pred_check
          %p159 = pneg %p56
        $region30: #{dyn_growing_hnn_forward.2} parent=23 // pred_check_branch
          %161 = sbr.rel (%p159) target = $region32
        $region31: #{dyn_growing_hnn_forward.2} parent=23 // pred_region
          %s162 = sand.u32 %s46, 1
          %s163 = sand.u32 %s46, 1
          %s164 = smul.addr %s163, 16
          %s165 = scalar_lea.vmem [#allocation2], %s164
          %s166 = smul.u32 2, %s10
          %s167 = smul.addr %s166, 4
          %s168 = scalar_lea.vmem %s1, %s167
          // Predicated region
          $region33: #{dyn_growing_hnn_forward.2} parent=31 // pred_check
            _
          $region34: #{dyn_growing_hnn_forward.2} parent=31 // pred_check_branch
            %170 = sbr.rel (0) target = $region36
          $region35: #{dyn_growing_hnn_forward.2} parent=31 // pred_region
            // Predicated region
            $region37: #{dyn_growing_hnn_forward.2} parent=35 // pred_check
              _
            $region38: #{dyn_growing_hnn_forward.2} parent=35 // pred_check_branch
              %172 = sbr.rel target = $region40
            $region39: #{dyn_growing_hnn_forward.2} parent=35 // pred_region
              // Predicated region
              $region52: #{dyn_growing_hnn_forward.2} parent=39 // pred_check
                _
              $region53: #{dyn_growing_hnn_forward.2} parent=39 // pred_check_branch
                %193 = sbr.rel (0) target = $region55
              $region54: #{dyn_growing_hnn_forward.2} parent=39 // pred_region
                loop: start=0, step=1, limit=1
                $region56: #{dyn_growing_hnn_forward.2} parent=54 // loop_pre_header
                  _
                $region57: #{dyn_growing_hnn_forward.2} parent=54 // loop_header
                  %s195 = sphi 0, %s199
                  %p196 = scmp.ge.s32.totalorder %s195, 1
                  %s200 = sphi %s168, %s168
                  %s201 = sphi %s165, %s165
                $region58: #{dyn_growing_hnn_forward.2} parent=54 // loop_header_branch
                  %198 = sbr.rel (%p196) target = $region62
                $region59: #{dyn_growing_hnn_forward.2} parent=54 // loop_body
                  _
                $region60: #{dyn_growing_hnn_forward.2} parent=54 // loop_footer
                  %s199 = sadd.s32 1, %s195
                $region61: #{dyn_growing_hnn_forward.2} parent=54 // loop_footer_branch
                  %194 = sbr.rel target = $region57
                $region62: #{dyn_growing_hnn_forward.2} parent=54 // loop_exit
                  _
                loop: start=0, step=1, limit=1
                $region63: #{dyn_growing_hnn_forward.2} parent=54 // loop_pre_header
                  _
                $region64: #{dyn_growing_hnn_forward.2} parent=54 // loop_header
                  %s204 = sphi 0, %s208
                  %p205 = scmp.ge.s32.totalorder %s204, 1
                  %s209 = sphi %s168, %s168
                  %s210 = sphi %s165, %s165
                $region65: #{dyn_growing_hnn_forward.2} parent=54 // loop_header_branch
                  %207 = sbr.rel (%p205) target = $region69
                $region66: #{dyn_growing_hnn_forward.2} parent=54 // loop_body
                  %v211 = vld [vmem:[%s209] sm:$0xf]
                  %212 = vst [vmem:[%s210] sm:$0xf] %v211
                  %v213 = vld [vmem:[%s209 + $0x4] sm:$0xf]
                  %214 = vst [vmem:[%s210 + $0x4] sm:$0xf] %v213
                  %v215 = vld [vmem:[%s209 + $0x10] sm:$0xf]
                  %216 = vst [vmem:[%s210 + $0x8] sm:$0xf] %v215
                  %v217 = vld [vmem:[%s209 + $0x14] sm:$0xf]
                  %218 = vst [vmem:[%s210 + $0xc] sm:$0xf] %v217
                $region67: #{dyn_growing_hnn_forward.2} parent=54 // loop_footer
                  %s208 = sadd.s32 1, %s204
                $region68: #{dyn_growing_hnn_forward.2} parent=54 // loop_footer_branch
                  %203 = sbr.rel target = $region64
                $region69: #{dyn_growing_hnn_forward.2} parent=54 // loop_exit
                  _
              $region55: #{dyn_growing_hnn_forward.2} parent=39 // pred_fallthru
                _
            $region40: #{dyn_growing_hnn_forward.2} parent=35 // pred_fallthru
              _
            // Predicated region
            $region41: #{dyn_growing_hnn_forward.2} parent=35 // pred_check
              _
            $region42: #{dyn_growing_hnn_forward.2} parent=35 // pred_check_branch
              %174 = sbr.rel (0) target = $region44
            $region43: #{dyn_growing_hnn_forward.2} parent=35 // pred_region
              loop: start=0, step=1, limit=1
              $region45: #{dyn_growing_hnn_forward.2} parent=43 // loop_pre_header
                _
              $region46: #{dyn_growing_hnn_forward.2} parent=43 // loop_header
                %s177 = sphi 0, %s181
                %p178 = scmp.ge.s32.totalorder %s177, 1
                %s182 = sphi %s168, %s168
                %s183 = sphi %s165, %s165
              $region47: #{dyn_growing_hnn_forward.2} parent=43 // loop_header_branch
                %180 = sbr.rel (%p178) target = $region51
              $region48: #{dyn_growing_hnn_forward.2} parent=43 // loop_body
                %v184 = vld [vmem:[%s182] sm:$0xf]
                %185 = vst [vmem:[%s183] sm:$0xf] %v184
                %v186 = vld [vmem:[%s182 + $0x4] sm:$0xf]
                %187 = vst [vmem:[%s183 + $0x4] sm:$0xf] %v186
                %v188 = vld [vmem:[%s182 + $0x10] sm:$0xf]
                %189 = vst [vmem:[%s183 + $0x8] sm:$0xf] %v188
                %v190 = vld [vmem:[%s182 + $0x14] sm:$0xf]
                %191 = vst [vmem:[%s183 + $0xc] sm:$0xf] %v190
              $region49: #{dyn_growing_hnn_forward.2} parent=43 // loop_footer
                %s181 = sadd.s32 1, %s177
              $region50: #{dyn_growing_hnn_forward.2} parent=43 // loop_footer_branch
                %176 = sbr.rel target = $region46
              $region51: #{dyn_growing_hnn_forward.2} parent=43 // loop_exit
                _
            $region44: #{dyn_growing_hnn_forward.2} parent=35 // pred_fallthru
              _
          $region36: #{dyn_growing_hnn_forward.2} parent=31 // pred_fallthru
            _
          %219 = vnop
        $region32: #{dyn_growing_hnn_forward.2} parent=23 // pred_fallthru
          _
      $region24: #{dyn_growing_hnn_forward.2} parent=5 // pred_fallthru
        _
      %p220 = scmp.le.s32.totalorder 1, %s10
      %p221 = scmp.lt.s32.totalorder %s10, 3
      %p222 = pnand %p220, %p221
      %p223 = pneg %p222
      // Predicated region
      $region70: #{dyn_growing_hnn_forward.2} parent=5 // pred_check
        _
      $region71: #{dyn_growing_hnn_forward.2} parent=5 // pred_check_branch
        %225 = sbr.rel (%p222) target = $region73
      $region72: #{dyn_growing_hnn_forward.2} parent=5 // pred_region
        %s226 = ssub.s32 %s10, 1
        %s227 = sand.u32 %s49, 1
        %s228 = sand.u32 %s49, 1
        %s229 = smul.addr %s228, 16
        %s230 = scalar_lea.vmem [#allocation2], %s229
        // Predicated region
        $region74: #{dyn_growing_hnn_forward.2} parent=72 // pred_check
          %p231 = pneg %p62
        $region75: #{dyn_growing_hnn_forward.2} parent=72 // pred_check_branch
          %233 = sbr.rel (%p231) target = $region77
        $region76: #{dyn_growing_hnn_forward.2} parent=72 // pred_region
          _
        $region77: #{dyn_growing_hnn_forward.2} parent=72 // pred_fallthru
          _
        %s234 = smul.u32 2, %s15
        %p235 = scmp.lt.s32.totalorder %s234, 3
        %s236 = scalar_select %p235, %s234, 3
        %s237 = smul.addr %s236, 8
        %s238 = scalar_lea.vmem %s0, %s237
        %p239 = pneg %p36
        %p240 = pneg %p33
        %s241 = sand.u32 %s49, 1
        %s242 = sand.u32 %s49, 1
        %s243 = smul.addr %s242, 16
        %s244 = scalar_lea.vmem [#allocation2], %s243
        %p245 = pneg %p62
        %p246 = pneg %p59
        %p247 = pneg %p83
        %p248 = pneg %p80
        %p249 = pneg %p104
        %p250 = pneg %p101
        %p251 = pneg %p125
        %p252 = pneg %p122
        %s253 = smul.u32 2, %s15
        %p254 = scmp.lt.s32.totalorder %s253, 3
        %s255 = scalar_select %p254, %s253, 3
        %s256 = smul.addr %s255, 8
        %s257 = scalar_lea.vmem %s0, %s256
        %s258 = smul.u32 2, %s15
        %s259 = smul.u32 2, %s15
        %p260 = scmp.eq.s32.totalorder %s15, 0
        // Predicated region
        $region78: #{dyn_growing_hnn_forward.2} parent=72 // pred_check
          %p261 = pneg %p260
        $region79: #{dyn_growing_hnn_forward.2} parent=72 // pred_check_branch
          %263 = sbr.rel (%p261) target = $region81
        $region80: #{dyn_growing_hnn_forward.2} parent=72 // pred_region
          %vm264 = vcmask 261120
          %265 = vst.msk [vmem:[%s4] sm:$0xff] %vm264, 0.0
          %266 = vst.msk [vmem:[%s4 + $0x8] sm:$0xff] %vm264, 0.0
        $region81: #{dyn_growing_hnn_forward.2} parent=72 // pred_fallthru
          _
        %v267 = vld [vmem:[%s257] sm:$0xff]
        %v268 = vld [vmem:[%s257 + $0x8] sm:$0xff]
        %v269 = vld [vmem:[%s3] sm:$0xf]
        %vm270 = vcmask 31744
        %v272 = vsel %vm270, %v267, 0
        %v275 = vsel %vm270, %v268, 0
        %vm277 = vcmask 1043456
        %v279 = vsel %vm277, %v269, 0
        %281 = vmatprep.subr.mxu0 0.0
        %282 = vmatpush1.msra.mxu0 %v279
        %283 = vmatprep.subr.mxu0 0.0
        %284 = vmatpush1.msra.mxu0 0.0
        %285 = vmatprep.subr.mxu0 0.0
        %286 = vmatpush1.msra.mxu0 0.0
        %287 = vmatprep.subr.mxu0 0.0
        %288 = vmatpush1.msra.mxu0 0.0
        %289 = vmatprep.subr.mxu0 0.0
        %290 = vmatpush1.msra.mxu0 0.0
        %291 = vmatprep.subr.mxu0 0.0
        %292 = vmatpush1.msra.mxu0 0.0
        %293 = vmatprep.subr.mxu0 0.0
        %294 = vmatpush1.msra.mxu0 0.0
        %295 = vmatprep.subr.mxu0 0.0
        %296 = vmatpush1.msra.mxu0 0.0
        %297 = vmatprep.subr.mxu0 0.0
        %298 = vmatpush1.msra.mxu0 0.0
        %299 = vmatprep.subr.mxu0 0.0
        %300 = vmatpush1.msra.mxu0 0.0
        %301 = vmatprep.subr.mxu0 0.0
        %302 = vmatpush1.msra.mxu0 0.0
        %303 = vmatprep.subr.mxu0 0.0
        %304 = vmatpush1.msra.mxu0 0.0
        %305 = vmatprep.subr.mxu0 0.0
        %306 = vmatpush1.msra.mxu0 0.0
        %307 = vmatprep.subr.mxu0 0.0
        %308 = vmatpush1.msra.mxu0 0.0
        %309 = vmatprep.subr.mxu0 0.0
        %310 = vmatpush1.msra.mxu0 0.0
        %311 = vmatprep.subr.mxu0 0.0
        %312 = vmatpush1.msra.mxu0 0.0
        %313 = vmatprep.subr.mxu0 0.0
        %314 = vmatpush1.msra.mxu0 0.0
        %315 = vmatprep.subr.mxu0 0.0
        %316 = vmatpush1.msra.mxu0 0.0
        %317 = vmatprep.subr.mxu0 0.0
        %318 = vmatpush1.msra.mxu0 0.0
        %319 = vmatprep.subr.mxu0 0.0
        %320 = vmatpush1.msra.mxu0 0.0
        %321 = vmatprep.subr.mxu0 0.0
        %322 = vmatpush1.msra.mxu0 0.0
        %323 = vmatprep.subr.mxu0 0.0
        %324 = vmatpush1.msra.mxu0 0.0
        %325 = vmatprep.subr.mxu0 0.0
        %326 = vmatpush1.msra.mxu0 0.0
        %327 = vmatprep.subr.mxu0 0.0
        %328 = vmatpush1.msra.mxu0 0.0
        %329 = vmatprep.subr.mxu0 0.0
        %330 = vmatpush1.msra.mxu0 0.0
        %331 = vmatprep.subr.mxu0 0.0
        %332 = vmatpush1.msra.mxu0 0.0
        %333 = vmatprep.subr.mxu0 0.0
        %334 = vmatpush1.msra.mxu0 0.0
        %335 = vmatprep.subr.mxu0 0.0
        %336 = vmatpush1.msra.mxu0 0.0
        %337 = vmatprep.subr.mxu0 0.0
        %338 = vmatpush1.msra.mxu0 0.0
        %339 = vmatprep.subr.mxu0 0.0
        %340 = vmatpush1.msra.mxu0 0.0
        %341 = vmatprep.subr.mxu0 0.0
        %342 = vmatpush1.msra.mxu0 0.0
        %343 = vmatprep.subr.mxu0 0.0
        %344 = vmatpush1.msra.mxu0 0.0
        %345 = vmatprep.mubr.f32.mxu0 0.0
        %346 = vmatmul.mubr.f32.gmra.mrb[0].mxu0 %v272
        %v347 = vpop.f32.mrb[0].mxu0
        %v348 = vadd.f32 0.0, %v347
        %v349 = vpop.f32.mrb[0].mxu0
        %350 = vmatprep.mubr.f32.mxu0 0.0
        %351 = vmatmul.mubr.f32.gmra.mrb[0].mxu0 %v275
        %v352 = vpop.f32.mrb[0].mxu0
        %v353 = vadd.f32 0.0, %v352
        %v354 = vpop.f32.mrb[0].mxu0
        %355 = vdwg.mxu0
        %v356 = vld [vmem:[%s230] sm:$0xf]
        %v357 = vld [vmem:[%s230 + $0x4] sm:$0xf]
        %v358 = vunpack.c.l.bf16 %v356
        %v359 = vunpack.c.l.bf16 %v357
        %360 = vxpose.xlu0.b32.start [1/16] %v358, 128
        %361 = vxpose.xlu0.b32.cont [2/16] %v359, 128
        %362 = vxpose.xlu0.b32.cont [3/16] 0.0, 128
        %363 = vxpose.xlu0.b32.cont [4/16] 0.0, 128
        %364 = vxpose.xlu0.b32.cont [5/16] 0.0, 128
        %365 = vxpose.xlu0.b32.cont [6/16] 0.0, 128
        %366 = vxpose.xlu0.b32.cont [7/16] 0.0, 128
        %367 = vxpose.xlu0.b32.cont [8/16] 0.0, 128
        %368 = vxpose.xlu0.b32.cont [9/16] 0.0, 128
        %369 = vxpose.xlu0.b32.cont [10/16] 0.0, 128
        %370 = vxpose.xlu0.b32.cont [11/16] 0.0, 128
        %371 = vxpose.xlu0.b32.cont [12/16] 0.0, 128
        %372 = vxpose.xlu0.b32.cont [13/16] 0.0, 128
        %373 = vxpose.xlu0.b32.cont [14/16] 0.0, 128
        %374 = vxpose.xlu0.b32.cont [15/16] 0.0, 128
        %375 = vxpose.xlu0.b32.end [16/16] 0.0, 128
        %v376 = vpop.trf.xlu0
        %v377 = vpop.trf.xlu0
        %v378 = vpop.trf.xlu0
        %v379 = vpop.trf.xlu0
        %v380 = vpop.trf.xlu0
        %v381 = vpop.trf.xlu0
        %v382 = vpop.trf.xlu0
        %v383 = vpop.trf.xlu0
        %v384 = vpop.trf.xlu0
        %v385 = vpop.trf.xlu0
        %v386 = vpop.trf.xlu0
        %v387 = vpop.trf.xlu0
        %v388 = vpop.trf.xlu0
        %v389 = vpop.trf.xlu0
        %v390 = vpop.trf.xlu0
        %v391 = vpop.trf.xlu0
        %vm392 = vcmask 130048
        %v394 = vsel %vm392, %v376, 0
        %396 = vmatprep.subr.mxu0 0.0
        %397 = vmatpush1.msra.mxu0 %v348
        %398 = vmatprep.subr.mxu0 0.0
        %399 = vmatpush1.msra.mxu0 %v353
        %400 = vmatprep.subr.mxu0 0.0
        %401 = vmatpush1.msra.mxu0 0.0
        %402 = vmatprep.subr.mxu0 0.0
        %403 = vmatpush1.msra.mxu0 0.0
        %404 = vmatprep.subr.mxu0 0.0
        %405 = vmatpush1.msra.mxu0 0.0
        %406 = vmatprep.subr.mxu0 0.0
        %407 = vmatpush1.msra.mxu0 0.0
        %408 = vmatprep.subr.mxu0 0.0
        %409 = vmatpush1.msra.mxu0 0.0
        %410 = vmatprep.subr.mxu0 0.0
        %411 = vmatpush1.msra.mxu0 0.0
        %412 = vmatprep.subr.mxu0 0.0
        %413 = vmatpush1.msra.mxu0 0.0
        %414 = vmatprep.subr.mxu0 0.0
        %415 = vmatpush1.msra.mxu0 0.0
        %416 = vmatprep.subr.mxu0 0.0
        %417 = vmatpush1.msra.mxu0 0.0
        %418 = vmatprep.subr.mxu0 0.0
        %419 = vmatpush1.msra.mxu0 0.0
        %420 = vmatprep.subr.mxu0 0.0
        %421 = vmatpush1.msra.mxu0 0.0
        %422 = vmatprep.subr.mxu0 0.0
        %423 = vmatpush1.msra.mxu0 0.0
        %424 = vmatprep.subr.mxu0 0.0
        %425 = vmatpush1.msra.mxu0 0.0
        %426 = vmatprep.subr.mxu0 0.0
        %427 = vmatpush1.msra.mxu0 0.0
        %428 = vmatprep.subr.mxu0 0.0
        %429 = vmatpush1.msra.mxu0 0.0
        %430 = vmatprep.subr.mxu0 0.0
        %431 = vmatpush1.msra.mxu0 0.0
        %432 = vmatprep.subr.mxu0 0.0
        %433 = vmatpush1.msra.mxu0 0.0
        %434 = vmatprep.subr.mxu0 0.0
        %435 = vmatpush1.msra.mxu0 0.0
        %436 = vmatprep.subr.mxu0 0.0
        %437 = vmatpush1.msra.mxu0 0.0
        %438 = vmatprep.subr.mxu0 0.0
        %439 = vmatpush1.msra.mxu0 0.0
        %440 = vmatprep.subr.mxu0 0.0
        %441 = vmatpush1.msra.mxu0 0.0
        %442 = vmatprep.subr.mxu0 0.0
        %443 = vmatpush1.msra.mxu0 0.0
        %444 = vmatprep.subr.mxu0 0.0
        %445 = vmatpush1.msra.mxu0 0.0
        %446 = vmatprep.subr.mxu0 0.0
        %447 = vmatpush1.msra.mxu0 0.0
        %448 = vmatprep.subr.mxu0 0.0
        %449 = vmatpush1.msra.mxu0 0.0
        %450 = vmatprep.subr.mxu0 0.0
        %451 = vmatpush1.msra.mxu0 0.0
        %452 = vmatprep.subr.mxu0 0.0
        %453 = vmatpush1.msra.mxu0 0.0
        %454 = vmatprep.subr.mxu0 0.0
        %455 = vmatpush1.msra.mxu0 0.0
        %456 = vmatprep.subr.mxu0 0.0
        %457 = vmatpush1.msra.mxu0 0.0
        %458 = vmatprep.subr.mxu0 0.0
        %459 = vmatpush1.msra.mxu0 0.0
        %460 = vmatprep.mubr.f32.mxu0 0.0
        %461 = vmatmul.mubr.f32.gmra.mrb[0].mxu0 %v394
        %v462 = vpop.f32.mrb[0].mxu0
        %v463 = vadd.f32 0.0, %v462
        %v464 = vpop.f32.mrb[0].mxu0
        %465 = vdwg.mxu0
        %v466 = vld [vmem:[%s4] sm:$0xff]
        %v467 = vld [vmem:[%s2] sm:$0xff]
        %469 = vset.pattern.permute.xlu0 0
        %470 = vperm.xlu0 %469, %v467
        %v471 = vpop.permute.xlu0 %470
        %v473 = vmul.f32 %v471, %v463
        %v474 = vadd.f32 %v466, %v473
        %vm475 = vcmask 261120
        %476 = vst.msk [vmem:[%s4] sm:$0xff] %vm475, %v474
        %s477 = scalar_lea.vmem %s230, 8 [#allocation2]
        %v478 = vld [vmem:[%s477] sm:$0xf]
        %v479 = vld [vmem:[%s477 + $0x4] sm:$0xf]
        %v480 = vunpack.c.l.bf16 %v478
        %v481 = vunpack.c.l.bf16 %v479
        %482 = vxpose.xlu0.b32.start [1/16] %v480, 128
        %483 = vxpose.xlu0.b32.cont [2/16] %v481, 128
        %484 = vxpose.xlu0.b32.cont [3/16] 0.0, 128
        %485 = vxpose.xlu0.b32.cont [4/16] 0.0, 128
        %486 = vxpose.xlu0.b32.cont [5/16] 0.0, 128
        %487 = vxpose.xlu0.b32.cont [6/16] 0.0, 128
        %488 = vxpose.xlu0.b32.cont [7/16] 0.0, 128
        %489 = vxpose.xlu0.b32.cont [8/16] 0.0, 128
        %490 = vxpose.xlu0.b32.cont [9/16] 0.0, 128
        %491 = vxpose.xlu0.b32.cont [10/16] 0.0, 128
        %492 = vxpose.xlu0.b32.cont [11/16] 0.0, 128
        %493 = vxpose.xlu0.b32.cont [12/16] 0.0, 128
        %494 = vxpose.xlu0.b32.cont [13/16] 0.0, 128
        %495 = vxpose.xlu0.b32.cont [14/16] 0.0, 128
        %496 = vxpose.xlu0.b32.cont [15/16] 0.0, 128
        %497 = vxpose.xlu0.b32.end [16/16] 0.0, 128
        %v498 = vpop.trf.xlu0
        %v499 = vpop.trf.xlu0
        %v500 = vpop.trf.xlu0
        %v501 = vpop.trf.xlu0
        %v502 = vpop.trf.xlu0
        %v503 = vpop.trf.xlu0
        %v504 = vpop.trf.xlu0
        %v505 = vpop.trf.xlu0
        %v506 = vpop.trf.xlu0
        %v507 = vpop.trf.xlu0
        %v508 = vpop.trf.xlu0
        %v509 = vpop.trf.xlu0
        %v510 = vpop.trf.xlu0
        %v511 = vpop.trf.xlu0
        %v512 = vpop.trf.xlu0
        %v513 = vpop.trf.xlu0
        %516 = vrot.lane.b32.xlu0 %v348, 96
        %v517 = vpop.permute.xlu0 %516
        %518 = vrot.lane.b32.xlu0 %v353, 96
        %v519 = vpop.permute.xlu0 %518
        %v523 = vsel %vm392, %v498, 0
        %525 = vmatprep.subr.mxu0 0.0
        %526 = vmatpush1.msra.mxu0 %v517
        %527 = vmatprep.subr.mxu0 0.0
        %528 = vmatpush1.msra.mxu0 %v519
        %529 = vmatprep.subr.mxu0 0.0
        %530 = vmatpush1.msra.mxu0 0.0
        %531 = vmatprep.subr.mxu0 0.0
        %532 = vmatpush1.msra.mxu0 0.0
        %533 = vmatprep.subr.mxu0 0.0
        %534 = vmatpush1.msra.mxu0 0.0
        %535 = vmatprep.subr.mxu0 0.0
        %536 = vmatpush1.msra.mxu0 0.0
        %537 = vmatprep.subr.mxu0 0.0
        %538 = vmatpush1.msra.mxu0 0.0
        %539 = vmatprep.subr.mxu0 0.0
        %540 = vmatpush1.msra.mxu0 0.0
        %541 = vmatprep.subr.mxu0 0.0
        %542 = vmatpush1.msra.mxu0 0.0
        %543 = vmatprep.subr.mxu0 0.0
        %544 = vmatpush1.msra.mxu0 0.0
        %545 = vmatprep.subr.mxu0 0.0
        %546 = vmatpush1.msra.mxu0 0.0
        %547 = vmatprep.subr.mxu0 0.0
        %548 = vmatpush1.msra.mxu0 0.0
        %549 = vmatprep.subr.mxu0 0.0
        %550 = vmatpush1.msra.mxu0 0.0
        %551 = vmatprep.subr.mxu0 0.0
        %552 = vmatpush1.msra.mxu0 0.0
        %553 = vmatprep.subr.mxu0 0.0
        %554 = vmatpush1.msra.mxu0 0.0
        %555 = vmatprep.subr.mxu0 0.0
        %556 = vmatpush1.msra.mxu0 0.0
        %557 = vmatprep.subr.mxu0 0.0
        %558 = vmatpush1.msra.mxu0 0.0
        %559 = vmatprep.subr.mxu0 0.0
        %560 = vmatpush1.msra.mxu0 0.0
        %561 = vmatprep.subr.mxu0 0.0
        %562 = vmatpush1.msra.mxu0 0.0
        %563 = vmatprep.subr.mxu0 0.0
        %564 = vmatpush1.msra.mxu0 0.0
        %565 = vmatprep.subr.mxu0 0.0
        %566 = vmatpush1.msra.mxu0 0.0
        %567 = vmatprep.subr.mxu0 0.0
        %568 = vmatpush1.msra.mxu0 0.0
        %569 = vmatprep.subr.mxu0 0.0
        %570 = vmatpush1.msra.mxu0 0.0
        %571 = vmatprep.subr.mxu0 0.0
        %572 = vmatpush1.msra.mxu0 0.0
        %573 = vmatprep.subr.mxu0 0.0
        %574 = vmatpush1.msra.mxu0 0.0
        %575 = vmatprep.subr.mxu0 0.0
        %576 = vmatpush1.msra.mxu0 0.0
        %577 = vmatprep.subr.mxu0 0.0
        %578 = vmatpush1.msra.mxu0 0.0
        %579 = vmatprep.subr.mxu0 0.0
        %580 = vmatpush1.msra.mxu0 0.0
        %581 = vmatprep.subr.mxu0 0.0
        %582 = vmatpush1.msra.mxu0 0.0
        %583 = vmatprep.subr.mxu0 0.0
        %584 = vmatpush1.msra.mxu0 0.0
        %585 = vmatprep.subr.mxu0 0.0
        %586 = vmatpush1.msra.mxu0 0.0
        %587 = vmatprep.subr.mxu0 0.0
        %588 = vmatpush1.msra.mxu0 0.0
        %589 = vmatprep.mubr.f32.mxu0 0.0
        %590 = vmatmul.mubr.f32.gmra.mrb[0].mxu0 %v523
        %v591 = vpop.f32.mrb[0].mxu0
        %v592 = vadd.f32 0.0, %v591
        %v593 = vpop.f32.mrb[0].mxu0
        %594 = vdwg.mxu0
        %s595 = scalar_lea.vmem %s4, 8
        %v596 = vld [vmem:[%s595] sm:$0xff]
        %s597 = scalar_lea.vmem %s2, 8
        %v598 = vld [vmem:[%s597] sm:$0xff]
        %600 = vset.pattern.permute.xlu0 0
        %601 = vperm.xlu0 %600, %v598
        %v602 = vpop.permute.xlu0 %601
        %v604 = vmul.f32 %v602, %v592
        %v605 = vadd.f32 %v596, %v604
        %606 = vst.msk [vmem:[%s595] sm:$0xff] %vm475, %v605
        // Predicated region
        $region82: #{dyn_growing_hnn_forward.2} parent=72 // pred_check
          %p607 = pneg %p122
        $region83: #{dyn_growing_hnn_forward.2} parent=72 // pred_check_branch
          %609 = sbr.rel (%p607) target = $region85
        $region84: #{dyn_growing_hnn_forward.2} parent=72 // pred_region
          _
        $region85: #{dyn_growing_hnn_forward.2} parent=72 // pred_fallthru
          _
        // Predicated region
        $region86: #{dyn_growing_hnn_forward.2} parent=72 // pred_check
          %p610 = pneg %p122
        $region87: #{dyn_growing_hnn_forward.2} parent=72 // pred_check_branch
          %612 = sbr.rel (%p610) target = $region89
        $region88: #{dyn_growing_hnn_forward.2} parent=72 // pred_region
          _
        $region89: #{dyn_growing_hnn_forward.2} parent=72 // pred_fallthru
          _
      $region73: #{dyn_growing_hnn_forward.2} parent=5 // pred_fallthru
        _
      %p613 = scmp.le.s32.totalorder 2, %s10
      // Predicated region
      $region90: #{dyn_growing_hnn_forward.2} parent=5 // pred_check
        %p614 = pneg %p613
      $region91: #{dyn_growing_hnn_forward.2} parent=5 // pred_check_branch
        %616 = sbr.rel (%p614) target = $region93
      $region92: #{dyn_growing_hnn_forward.2} parent=5 // pred_region
        %s617 = ssub.s32 %s10, 2
      $region93: #{dyn_growing_hnn_forward.2} parent=5 // pred_fallthru
        _
    $region6: #{dyn_growing_hnn_forward.2} parent=1 // loop_footer
      %s14 = sadd.s32 1, %s10
    $region7: #{dyn_growing_hnn_forward.2} parent=1 // loop_footer_branch
      %9 = sbr.rel target = $region3
    $region8: #{dyn_growing_hnn_forward.2} parent=1 // loop_exit
      _

// kernel: dyn_growing_hnn_forward.3
$region0: #{dyn_growing_hnn_forward.3}
  #allocation0 [shape = 'u32[]', space=smem, size = 0x4, offset = 0x4, fixed_abs, tag = 'smem constant byte address 0x4 - core index']
  #allocation1 [shape = 'u32[144,128]{1,0:T(1,128)}', space=vmem, size = 0x12000, scoped, tag = 'internal scratch']
  %s0 = inlined_call_operand.vmem [shape: bf16[2,32,8], index: 0, kind: input, shape index: {}]
  %s1 = inlined_call_operand.vmem [shape: f32[2,32,1], index: 1, kind: input, shape index: {}]
  %s2 = inlined_call_operand.vmem [shape: f32[2,8,32], index: 2, kind: input, shape index: {}]
  %s3 = inlined_call_operand.vmem [shape: f32[2,1,32], index: 3, kind: input, shape index: {}]
  %s4 = inlined_call_operand.vmem [shape: f32[2,32,32], index: 4, kind: input, shape index: {}]
  %s5 = inlined_call_operand.vmem [shape: f32[1,32], index: 5, kind: input, shape index: {}]
  %s6 = inlined_call_operand.vmem [shape: f32[32,96], index: 6, kind: input, shape index: {}]
  %s7 = inlined_call_operand.vmem [shape: f32[1,96], index: 7, kind: input, shape index: {}]
  %s8 = inlined_call_operand.vmem [shape: f32[32,96], index: 8, kind: input, shape index: {}]
  %s9 = inlined_call_operand.vmem [shape: f32[1,96], index: 9, kind: input, shape index: {}]
  %s10 = inlined_call_operand.vmem [shape: f32[32,32], index: 10, kind: input, shape index: {}, may-alias: {10,13}]
  %s11 = inlined_call_operand.vmem [shape: f32[32,32], index: 11, kind: input, shape index: {}]
  %s12 = inlined_call_operand.vmem [shape: f32[1,32], index: 12, kind: input, shape index: {}]
  %s13 = inlined_call_operand.vmem [shape: f32[32,32], index: 13, kind: output, shape index: {0}, may-alias: {10,13}]
  %s14 = inlined_call_operand.vmem [shape: f32[32,32], index: 14, kind: output, shape index: {1}]
  %15 = xla_tuple %s13, %s14
  %s16 = sld [smem:[#allocation0]]
  $region172: #{dyn_growing_hnn_forward.3} parent=0
    _
  %s18 = ssub.s32 1, %s16
  %s19 = scalar_select 0, %s18, %s16
  $region1: #{dyn_growing_hnn_forward.3} parent=0
    #allocation2 [shape = 'u8[16384]{0}', space=vmem, size = 0x4000, scoped, tag = 'input window, operand 0']
    #allocation3 [shape = 'u8[32768]{0}', space=vmem, size = 0x8000, scoped, tag = 'input window, operand 1']
    loop: start=0, step=1, limit=4
    $region2: #{dyn_growing_hnn_forward.3} parent=1 // loop_pre_header
      _
    $region3: #{dyn_growing_hnn_forward.3} parent=1 // loop_header
      %s21 = sphi 0, %s25
      %p22 = scmp.ge.s32.totalorder %s21, 4
      %s31 = sphi 0, %s33
      %s34 = sphi 0, %s31
      %s35 = sphi 0, %s34
      %s51 = sphi 0, %s35
      %s57 = sphi 0, %s59
      %s60 = sphi 0, %s57
      %s61 = sphi 0, %s60
      %s77 = sphi 0, %s61
      %s81 = sphi 0, %s81
      %s83 = sphi 0, %s81
      %s84 = sphi 0, %s83
      %s98 = sphi 0, %s84
      %s102 = sphi 0, %s102
      %s104 = sphi 0, %s102
      %s105 = sphi 0, %s104
      %s119 = sphi 0, %s105
      %s123 = sphi 0, %s123
      %s125 = sphi 0, %s123
      %s126 = sphi 0, %s125
      %s140 = sphi 0, %s126
      %s144 = sphi 0, %s144
      %s146 = sphi 0, %s144
      %s147 = sphi 0, %s146
      %s161 = sphi 0, %s147
      %s165 = sphi 0, %s165
      %s167 = sphi 0, %s165
      %s168 = sphi 0, %s167
      %s182 = sphi 0, %s168
      %s186 = sphi 0, %s186
      %s188 = sphi 0, %s186
      %s189 = sphi 0, %s188
      %s203 = sphi 0, %s189
      %s207 = sphi 0, %s207
      %s209 = sphi 0, %s207
      %s210 = sphi 0, %s209
      %s224 = sphi 0, %s210
      %s228 = sphi 0, %s228
      %s230 = sphi 0, %s228
      %s231 = sphi 0, %s230
      %s245 = sphi 0, %s231
      %s251 = sphi 0, %s253
      %s254 = sphi 0, %s251
      %s255 = sphi 0, %s254
      %s271 = sphi 0, %s255
      %s275 = sphi 0, %s275
      %s277 = sphi 0, %s275
      %s278 = sphi 0, %s277
      %s292 = sphi 0, %s278
      %s296 = sphi 0, %s296
      %s298 = sphi 0, %s296
      %s299 = sphi 0, %s298
      %s313 = sphi 0, %s299
      %s319 = sphi 0, %s321
      %s322 = sphi 0, %s319
      %s323 = sphi 0, %s322
      %s339 = sphi 0, %s323
      %s345 = sphi 0, %s347
      %s348 = sphi 0, %s345
      %s349 = sphi 0, %s348
      %s365 = sphi 0, %s349
    $region4: #{dyn_growing_hnn_forward.3} parent=1 // loop_header_branch
      %24 = sbr.rel (%p22) target = $region8
    $region5: #{dyn_growing_hnn_forward.3} parent=1 // loop_body
      %s26 = ssub.s32 %s21, 1
      %s27 = ssub.s32 %s21, 2
      %s28 = sadd.s32 %s21, 1
      %s29 = ssub.s32 %s21, %s28
      %p30 = scmp.eq.s32.totalorder %s29, 0
      %s32 = sadd.s32 %s31, 1
      %s33 = scalar_select %p30, %s31, %s32
      %p36 = pneg %p30
      %p37 = scmp.eq.s32.totalorder %s21, 1
      %p38 = por %p36, %p37
      %p39 = scmp.ne.s32.totalorder %s31, %s34
      %p40 = scmp.eq.s32.totalorder %s21, 0
      %p41 = por %p39, %p40
      %p42 = scmp.ne.s32.totalorder %s31, %s34
      %p43 = scmp.eq.s32.totalorder %s26, 1
      %p44 = por %p42, %p43
      %p45 = scmp.ne.s32.totalorder %s34, %s35
      %p46 = scmp.eq.s32.totalorder %s26, 0
      %p47 = por %p45, %p46
      %p48 = scmp.ne.s32.totalorder %s34, %s35
      %p49 = scmp.eq.s32.totalorder %s27, 1
      %p50 = por %p48, %p49
      %p52 = scmp.ne.s32.totalorder %s35, %s51
      %p53 = scmp.eq.s32.totalorder %s27, 0
      %p54 = por %p52, %p53
      %s55 = ssub.s32 %s21, %s28
      %p56 = scmp.eq.s32.totalorder %s55, 0
      %s58 = sadd.s32 %s57, 1
      %s59 = scalar_select %p56, %s57, %s58
      %p62 = pneg %p56
      %p63 = scmp.eq.s32.totalorder %s21, 1
      %p64 = por %p62, %p63
      %p65 = scmp.ne.s32.totalorder %s57, %s60
      %p66 = scmp.eq.s32.totalorder %s21, 0
      %p67 = por %p65, %p66
      %p68 = scmp.ne.s32.totalorder %s57, %s60
      %p69 = scmp.eq.s32.totalorder %s26, 1
      %p70 = por %p68, %p69
      %p71 = scmp.ne.s32.totalorder %s60, %s61
      %p72 = scmp.eq.s32.totalorder %s26, 0
      %p73 = por %p71, %p72
      %p74 = scmp.ne.s32.totalorder %s60, %s61
      %p75 = scmp.eq.s32.totalorder %s27, 1
      %p76 = por %p74, %p75
      %p78 = scmp.ne.s32.totalorder %s61, %s77
      %p79 = scmp.eq.s32.totalorder %s27, 0
      %p80 = por %p78, %p79
      %s82 = sadd.s32 %s81, 1
      %p85 = scmp.eq.s32.totalorder %s21, 1
      %p86 = scmp.ne.s32.totalorder %s81, %s83
      %p87 = scmp.eq.s32.totalorder %s21, 0
      %p88 = por %p86, %p87
      %p89 = scmp.ne.s32.totalorder %s81, %s83
      %p90 = scmp.eq.s32.totalorder %s26, 1
      %p91 = por %p89, %p90
      %p92 = scmp.ne.s32.totalorder %s83, %s84
      %p93 = scmp.eq.s32.totalorder %s26, 0
      %p94 = por %p92, %p93
      %p95 = scmp.ne.s32.totalorder %s83, %s84
      %p96 = scmp.eq.s32.totalorder %s27, 1
      %p97 = por %p95, %p96
      %p99 = scmp.ne.s32.totalorder %s84, %s98
      %p100 = scmp.eq.s32.totalorder %s27, 0
      %p101 = por %p99, %p100
      %s103 = sadd.s32 %s102, 1
      %p106 = scmp.eq.s32.totalorder %s21, 1
      %p107 = scmp.ne.s32.totalorder %s102, %s104
      %p108 = scmp.eq.s32.totalorder %s21, 0
      %p109 = por %p107, %p108
      %p110 = scmp.ne.s32.totalorder %s102, %s104
      %p111 = scmp.eq.s32.totalorder %s26, 1
      %p112 = por %p110, %p111
      %p113 = scmp.ne.s32.totalorder %s104, %s105
      %p114 = scmp.eq.s32.totalorder %s26, 0
      %p115 = por %p113, %p114
      %p116 = scmp.ne.s32.totalorder %s104, %s105
      %p117 = scmp.eq.s32.totalorder %s27, 1
      %p118 = por %p116, %p117
      %p120 = scmp.ne.s32.totalorder %s105, %s119
      %p121 = scmp.eq.s32.totalorder %s27, 0
      %p122 = por %p120, %p121
      %s124 = sadd.s32 %s123, 1
      %p127 = scmp.eq.s32.totalorder %s21, 1
      %p128 = scmp.ne.s32.totalorder %s123, %s125
      %p129 = scmp.eq.s32.totalorder %s21, 0
      %p130 = por %p128, %p129
      %p131 = scmp.ne.s32.totalorder %s123, %s125
      %p132 = scmp.eq.s32.totalorder %s26, 1
      %p133 = por %p131, %p132
      %p134 = scmp.ne.s32.totalorder %s125, %s126
      %p135 = scmp.eq.s32.totalorder %s26, 0
      %p136 = por %p134, %p135
      %p137 = scmp.ne.s32.totalorder %s125, %s126
      %p138 = scmp.eq.s32.totalorder %s27, 1
      %p139 = por %p137, %p138
      %p141 = scmp.ne.s32.totalorder %s126, %s140
      %p142 = scmp.eq.s32.totalorder %s27, 0
      %p143 = por %p141, %p142
      %s145 = sadd.s32 %s144, 1
      %p148 = scmp.eq.s32.totalorder %s21, 1
      %p149 = scmp.ne.s32.totalorder %s144, %s146
      %p150 = scmp.eq.s32.totalorder %s21, 0
      %p151 = por %p149, %p150
      %p152 = scmp.ne.s32.totalorder %s144, %s146
      %p153 = scmp.eq.s32.totalorder %s26, 1
      %p154 = por %p152, %p153
      %p155 = scmp.ne.s32.totalorder %s146, %s147
      %p156 = scmp.eq.s32.totalorder %s26, 0
      %p157 = por %p155, %p156
      %p158 = scmp.ne.s32.totalorder %s146, %s147
      %p159 = scmp.eq.s32.totalorder %s27, 1
      %p160 = por %p158, %p159
      %p162 = scmp.ne.s32.totalorder %s147, %s161
      %p163 = scmp.eq.s32.totalorder %s27, 0
      %p164 = por %p162, %p163
      %s166 = sadd.s32 %s165, 1
      %p169 = scmp.eq.s32.totalorder %s21, 1
      %p170 = scmp.ne.s32.totalorder %s165, %s167
      %p171 = scmp.eq.s32.totalorder %s21, 0
      %p172 = por %p170, %p171
      %p173 = scmp.ne.s32.totalorder %s165, %s167
      %p174 = scmp.eq.s32.totalorder %s26, 1
      %p175 = por %p173, %p174
      %p176 = scmp.ne.s32.totalorder %s167, %s168
      %p177 = scmp.eq.s32.totalorder %s26, 0
      %p178 = por %p176, %p177
      %p179 = scmp.ne.s32.totalorder %s167, %s168
      %p180 = scmp.eq.s32.totalorder %s27, 1
      %p181 = por %p179, %p180
      %p183 = scmp.ne.s32.totalorder %s168, %s182
      %p184 = scmp.eq.s32.totalorder %s27, 0
      %p185 = por %p183, %p184
      %s187 = sadd.s32 %s186, 1
      %p190 = scmp.eq.s32.totalorder %s21, 1
      %p191 = scmp.ne.s32.totalorder %s186, %s188
      %p192 = scmp.eq.s32.totalorder %s21, 0
      %p193 = por %p191, %p192
      %p194 = scmp.ne.s32.totalorder %s186, %s188
      %p195 = scmp.eq.s32.totalorder %s26, 1
      %p196 = por %p194, %p195
      %p197 = scmp.ne.s32.totalorder %s188, %s189
      %p198 = scmp.eq.s32.totalorder %s26, 0
      %p199 = por %p197, %p198
      %p200 = scmp.ne.s32.totalorder %s188, %s189
      %p201 = scmp.eq.s32.totalorder %s27, 1
      %p202 = por %p200, %p201
      %p204 = scmp.ne.s32.totalorder %s189, %s203
      %p205 = scmp.eq.s32.totalorder %s27, 0
      %p206 = por %p204, %p205
      %s208 = sadd.s32 %s207, 1
      %p211 = scmp.eq.s32.totalorder %s21, 1
      %p212 = scmp.ne.s32.totalorder %s207, %s209
      %p213 = scmp.eq.s32.totalorder %s21, 0
      %p214 = por %p212, %p213
      %p215 = scmp.ne.s32.totalorder %s207, %s209
      %p216 = scmp.eq.s32.totalorder %s26, 1
      %p217 = por %p215, %p216
      %p218 = scmp.ne.s32.totalorder %s209, %s210
      %p219 = scmp.eq.s32.totalorder %s26, 0
      %p220 = por %p218, %p219
      %p221 = scmp.ne.s32.totalorder %s209, %s210
      %p222 = scmp.eq.s32.totalorder %s27, 1
      %p223 = por %p221, %p222
      %p225 = scmp.ne.s32.totalorder %s210, %s224
      %p226 = scmp.eq.s32.totalorder %s27, 0
      %p227 = por %p225, %p226
      %s229 = sadd.s32 %s228, 1
      %p232 = scmp.eq.s32.totalorder %s21, 1
      %p233 = scmp.ne.s32.totalorder %s228, %s230
      %p234 = scmp.eq.s32.totalorder %s21, 0
      %p235 = por %p233, %p234
      %p236 = scmp.ne.s32.totalorder %s228, %s230
      %p237 = scmp.eq.s32.totalorder %s26, 1
      %p238 = por %p236, %p237
      %p239 = scmp.ne.s32.totalorder %s230, %s231
      %p240 = scmp.eq.s32.totalorder %s26, 0
      %p241 = por %p239, %p240
      %p242 = scmp.ne.s32.totalorder %s230, %s231
      %p243 = scmp.eq.s32.totalorder %s27, 1
      %p244 = por %p242, %p243
      %p246 = scmp.ne.s32.totalorder %s231, %s245
      %p247 = scmp.eq.s32.totalorder %s27, 0
      %p248 = por %p246, %p247
      %s249 = ssub.s32 %s21, %s28
      %p250 = scmp.eq.s32.totalorder %s249, 0
      %s252 = sadd.s32 %s251, 1
      %s253 = scalar_select %p250, %s251, %s252
      %p256 = pneg %p250
      %p257 = scmp.eq.s32.totalorder %s21, 1
      %p258 = por %p256, %p257
      %p259 = scmp.ne.s32.totalorder %s251, %s254
      %p260 = scmp.eq.s32.totalorder %s21, 0
      %p261 = por %p259, %p260
      %p262 = scmp.ne.s32.totalorder %s251, %s254
      %p263 = scmp.eq.s32.totalorder %s26, 1
      %p264 = por %p262, %p263
      %p265 = scmp.ne.s32.totalorder %s254, %s255
      %p266 = scmp.eq.s32.totalorder %s26, 0
      %p267 = por %p265, %p266
      %p268 = scmp.ne.s32.totalorder %s254, %s255
      %p269 = scmp.eq.s32.totalorder %s27, 1
      %p270 = por %p268, %p269
      %p272 = scmp.ne.s32.totalorder %s255, %s271
      %p273 = scmp.eq.s32.totalorder %s27, 0
      %p274 = por %p272, %p273
      %s276 = sadd.s32 %s275, 1
      %p279 = scmp.eq.s32.totalorder %s21, 1
      %p280 = scmp.ne.s32.totalorder %s275, %s277
      %p281 = scmp.eq.s32.totalorder %s21, 0
      %p282 = por %p280, %p281
      %p283 = scmp.ne.s32.totalorder %s275, %s277
      %p284 = scmp.eq.s32.totalorder %s26, 1
      %p285 = por %p283, %p284
      %p286 = scmp.ne.s32.totalorder %s277, %s278
      %p287 = scmp.eq.s32.totalorder %s26, 0
      %p288 = por %p286, %p287
      %p289 = scmp.ne.s32.totalorder %s277, %s278
      %p290 = scmp.eq.s32.totalorder %s27, 1
      %p291 = por %p289, %p290
      %p293 = scmp.ne.s32.totalorder %s278, %s292
      %p294 = scmp.eq.s32.totalorder %s27, 0
      %p295 = por %p293, %p294
      %s297 = sadd.s32 %s296, 1
      %p300 = scmp.eq.s32.totalorder %s21, 1
      %p301 = scmp.ne.s32.totalorder %s296, %s298
      %p302 = scmp.eq.s32.totalorder %s21, 0
      %p303 = por %p301, %p302
      %p304 = scmp.ne.s32.totalorder %s296, %s298
      %p305 = scmp.eq.s32.totalorder %s26, 1
      %p306 = por %p304, %p305
      %p307 = scmp.ne.s32.totalorder %s298, %s299
      %p308 = scmp.eq.s32.totalorder %s26, 0
      %p309 = por %p307, %p308
      %p310 = scmp.ne.s32.totalorder %s298, %s299
      %p311 = scmp.eq.s32.totalorder %s27, 1
      %p312 = por %p310, %p311
      %p314 = scmp.ne.s32.totalorder %s299, %s313
      %p315 = scmp.eq.s32.totalorder %s27, 0
      %p316 = por %p314, %p315
      %s317 = ssub.s32 %s21, %s28
      %p318 = scmp.eq.s32.totalorder %s317, 0
      %s320 = sadd.s32 %s319, 1
      %s321 = scalar_select %p318, %s319, %s320
      %p324 = pneg %p318
      %p325 = scmp.eq.s32.totalorder %s21, 1
      %p326 = por %p324, %p325
      %p327 = scmp.ne.s32.totalorder %s319, %s322
      %p328 = scmp.eq.s32.totalorder %s21, 0
      %p329 = por %p327, %p328
      %p330 = scmp.ne.s32.totalorder %s319, %s322
      %p331 = scmp.eq.s32.totalorder %s26, 1
      %p332 = por %p330, %p331
      %p333 = scmp.ne.s32.totalorder %s322, %s323
      %p334 = scmp.eq.s32.totalorder %s26, 0
      %p335 = por %p333, %p334
      %p336 = scmp.ne.s32.totalorder %s322, %s323
      %p337 = scmp.eq.s32.totalorder %s27, 1
      %p338 = por %p336, %p337
      %p340 = scmp.ne.s32.totalorder %s323, %s339
      %p341 = scmp.eq.s32.totalorder %s27, 0
      %p342 = por %p340, %p341
      %s343 = ssub.s32 %s21, %s28
      %p344 = scmp.eq.s32.totalorder %s343, 0
      %s346 = sadd.s32 %s345, 1
      %s347 = scalar_select %p344, %s345, %s346
      %p350 = pneg %p344
      %p351 = scmp.eq.s32.totalorder %s21, 1
      %p352 = por %p350, %p351
      %p353 = scmp.ne.s32.totalorder %s345, %s348
      %p354 = scmp.eq.s32.totalorder %s21, 0
      %p355 = por %p353, %p354
      %p356 = scmp.ne.s32.totalorder %s345, %s348
      %p357 = scmp.eq.s32.totalorder %s26, 1
      %p358 = por %p356, %p357
      %p359 = scmp.ne.s32.totalorder %s348, %s349
      %p360 = scmp.eq.s32.totalorder %s26, 0
      %p361 = por %p359, %p360
      %p362 = scmp.ne.s32.totalorder %s348, %s349
      %p363 = scmp.eq.s32.totalorder %s27, 1
      %p364 = por %p362, %p363
      %p366 = scmp.ne.s32.totalorder %s349, %s365
      %p367 = scmp.eq.s32.totalorder %s27, 0
      %p368 = por %p366, %p367
      %p369 = scmp.le.s32.totalorder 1, %s21
      %p370 = scmp.lt.s32.totalorder %s21, 3
      %p371 = pnand %p369, %p370
      %p372 = pneg %p371
      // Predicated region
      $region9: #{dyn_growing_hnn_forward.3} parent=5 // pred_check
        _
      $region10: #{dyn_growing_hnn_forward.3} parent=5 // pred_check_branch
        %374 = sbr.rel (%p371) target = $region12
      $region11: #{dyn_growing_hnn_forward.3} parent=5 // pred_region
        %s375 = ssub.s32 %s21, 1
        // Predicated region
        $region13: #{dyn_growing_hnn_forward.3} parent=11 // pred_check
          %p376 = pneg %p94
        $region14: #{dyn_growing_hnn_forward.3} parent=11 // pred_check_branch
          %378 = sbr.rel (%p376) target = $region16
        $region15: #{dyn_growing_hnn_forward.3} parent=11 // pred_region
          _
        $region16: #{dyn_growing_hnn_forward.3} parent=11 // pred_fallthru
          _
        // Predicated region
        $region17: #{dyn_growing_hnn_forward.3} parent=11 // pred_check
          %p379 = pneg %p115
        $region18: #{dyn_growing_hnn_forward.3} parent=11 // pred_check_branch
          %381 = sbr.rel (%p379) target = $region20
        $region19: #{dyn_growing_hnn_forward.3} parent=11 // pred_region
          _
        $region20: #{dyn_growing_hnn_forward.3} parent=11 // pred_fallthru
          _
        // Predicated region
        $region21: #{dyn_growing_hnn_forward.3} parent=11 // pred_check
          %p382 = pneg %p136
        $region22: #{dyn_growing_hnn_forward.3} parent=11 // pred_check_branch
          %384 = sbr.rel (%p382) target = $region24
        $region23: #{dyn_growing_hnn_forward.3} parent=11 // pred_region
          _
        $region24: #{dyn_growing_hnn_forward.3} parent=11 // pred_fallthru
          _
        // Predicated region
        $region25: #{dyn_growing_hnn_forward.3} parent=11 // pred_check
          %p385 = pneg %p157
        $region26: #{dyn_growing_hnn_forward.3} parent=11 // pred_check_branch
          %387 = sbr.rel (%p385) target = $region28
        $region27: #{dyn_growing_hnn_forward.3} parent=11 // pred_region
          _
        $region28: #{dyn_growing_hnn_forward.3} parent=11 // pred_fallthru
          _
        // Predicated region
        $region29: #{dyn_growing_hnn_forward.3} parent=11 // pred_check
          %p388 = pneg %p178
        $region30: #{dyn_growing_hnn_forward.3} parent=11 // pred_check_branch
          %390 = sbr.rel (%p388) target = $region32
        $region31: #{dyn_growing_hnn_forward.3} parent=11 // pred_region
          _
        $region32: #{dyn_growing_hnn_forward.3} parent=11 // pred_fallthru
          _
        // Predicated region
        $region33: #{dyn_growing_hnn_forward.3} parent=11 // pred_check
          %p391 = pneg %p199
        $region34: #{dyn_growing_hnn_forward.3} parent=11 // pred_check_branch
          %393 = sbr.rel (%p391) target = $region36
        $region35: #{dyn_growing_hnn_forward.3} parent=11 // pred_region
          _
        $region36: #{dyn_growing_hnn_forward.3} parent=11 // pred_fallthru
          _
        // Predicated region
        $region37: #{dyn_growing_hnn_forward.3} parent=11 // pred_check
          %p394 = pneg %p220
        $region38: #{dyn_growing_hnn_forward.3} parent=11 // pred_check_branch
          %396 = sbr.rel (%p394) target = $region40
        $region39: #{dyn_growing_hnn_forward.3} parent=11 // pred_region
          _
        $region40: #{dyn_growing_hnn_forward.3} parent=11 // pred_fallthru
          _
        // Predicated region
        $region41: #{dyn_growing_hnn_forward.3} parent=11 // pred_check
          %p397 = pneg %p241
        $region42: #{dyn_growing_hnn_forward.3} parent=11 // pred_check_branch
          %399 = sbr.rel (%p397) target = $region44
        $region43: #{dyn_growing_hnn_forward.3} parent=11 // pred_region
          _
        $region44: #{dyn_growing_hnn_forward.3} parent=11 // pred_fallthru
          _
        // Predicated region
        $region45: #{dyn_growing_hnn_forward.3} parent=11 // pred_check
          %p400 = pneg %p288
        $region46: #{dyn_growing_hnn_forward.3} parent=11 // pred_check_branch
          %402 = sbr.rel (%p400) target = $region48
        $region47: #{dyn_growing_hnn_forward.3} parent=11 // pred_region
          _
        $region48: #{dyn_growing_hnn_forward.3} parent=11 // pred_fallthru
          _
        // Predicated region
        $region49: #{dyn_growing_hnn_forward.3} parent=11 // pred_check
          %p403 = pneg %p309
        $region50: #{dyn_growing_hnn_forward.3} parent=11 // pred_check_branch
          %405 = sbr.rel (%p403) target = $region52
        $region51: #{dyn_growing_hnn_forward.3} parent=11 // pred_region
          _
        $region52: #{dyn_growing_hnn_forward.3} parent=11 // pred_fallthru
          _
      $region12: #{dyn_growing_hnn_forward.3} parent=5 // pred_fallthru
        _
      %p406 = scmp.lt.s32.totalorder %s21, 2
      // Predicated region
      $region53: #{dyn_growing_hnn_forward.3} parent=5 // pred_check
        %p407 = pneg %p406
      $region54: #{dyn_growing_hnn_forward.3} parent=5 // pred_check_branch
        %409 = sbr.rel (%p407) target = $region56
      $region55: #{dyn_growing_hnn_forward.3} parent=5 // pred_region
        // Predicated region
        $region57: #{dyn_growing_hnn_forward.3} parent=55 // pred_check
          %p410 = pneg %p41
        $region58: #{dyn_growing_hnn_forward.3} parent=55 // pred_check_branch
          %412 = sbr.rel (%p410) target = $region60
        $region59: #{dyn_growing_hnn_forward.3} parent=55 // pred_region
          %s413 = sand.u32 %s31, 1
          %s414 = sand.u32 %s31, 1
          %s415 = smul.addr %s414, 16
          %s416 = scalar_lea.vmem [#allocation2], %s415
          %s417 = smul.u32 2, %s21
          %s418 = smul.addr %s417, 4
          %s419 = scalar_lea.vmem %s0, %s418
          // Predicated region
          $region61: #{dyn_growing_hnn_forward.3} parent=59 // pred_check
            _
          $region62: #{dyn_growing_hnn_forward.3} parent=59 // pred_check_branch
            %421 = sbr.rel (0) target = $region64
          $region63: #{dyn_growing_hnn_forward.3} parent=59 // pred_region
            // Predicated region
            $region65: #{dyn_growing_hnn_forward.3} parent=63 // pred_check
              _
            $region66: #{dyn_growing_hnn_forward.3} parent=63 // pred_check_branch
              %423 = sbr.rel target = $region68
            $region67: #{dyn_growing_hnn_forward.3} parent=63 // pred_region
              // Predicated region
              $region80: #{dyn_growing_hnn_forward.3} parent=67 // pred_check
                _
              $region81: #{dyn_growing_hnn_forward.3} parent=67 // pred_check_branch
                %444 = sbr.rel (0) target = $region83
              $region82: #{dyn_growing_hnn_forward.3} parent=67 // pred_region
                loop: start=0, step=1, limit=1
                $region84: #{dyn_growing_hnn_forward.3} parent=82 // loop_pre_header
                  _
                $region85: #{dyn_growing_hnn_forward.3} parent=82 // loop_header
                  %s446 = sphi 0, %s450
                  %p447 = scmp.ge.s32.totalorder %s446, 1
                  %s451 = sphi %s419, %s419
                  %s452 = sphi %s416, %s416
                $region86: #{dyn_growing_hnn_forward.3} parent=82 // loop_header_branch
                  %449 = sbr.rel (%p447) target = $region90
                $region87: #{dyn_growing_hnn_forward.3} parent=82 // loop_body
                  _
                $region88: #{dyn_growing_hnn_forward.3} parent=82 // loop_footer
                  %s450 = sadd.s32 1, %s446
                $region89: #{dyn_growing_hnn_forward.3} parent=82 // loop_footer_branch
                  %445 = sbr.rel target = $region85
                $region90: #{dyn_growing_hnn_forward.3} parent=82 // loop_exit
                  _
                loop: start=0, step=1, limit=1
                $region91: #{dyn_growing_hnn_forward.3} parent=82 // loop_pre_header
                  _
                $region92: #{dyn_growing_hnn_forward.3} parent=82 // loop_header
                  %s455 = sphi 0, %s459
                  %p456 = scmp.ge.s32.totalorder %s455, 1
                  %s460 = sphi %s419, %s419
                  %s461 = sphi %s416, %s416
                $region93: #{dyn_growing_hnn_forward.3} parent=82 // loop_header_branch
                  %458 = sbr.rel (%p456) target = $region97
                $region94: #{dyn_growing_hnn_forward.3} parent=82 // loop_body
                  %v462 = vld [vmem:[%s460] sm:$0xf]
                  %463 = vst [vmem:[%s461] sm:$0xf] %v462
                  %v464 = vld [vmem:[%s460 + $0x4] sm:$0xf]
                  %465 = vst [vmem:[%s461 + $0x4] sm:$0xf] %v464
                  %v466 = vld [vmem:[%s460 + $0x10] sm:$0xf]
                  %467 = vst [vmem:[%s461 + $0x8] sm:$0xf] %v466
                  %v468 = vld [vmem:[%s460 + $0x14] sm:$0xf]
                  %469 = vst [vmem:[%s461 + $0xc] sm:$0xf] %v468
                $region95: #{dyn_growing_hnn_forward.3} parent=82 // loop_footer
                  %s459 = sadd.s32 1, %s455
                $region96: #{dyn_growing_hnn_forward.3} parent=82 // loop_footer_branch
                  %454 = sbr.rel target = $region92
                $region97: #{dyn_growing_hnn_forward.3} parent=82 // loop_exit
                  _
              $region83: #{dyn_growing_hnn_forward.3} parent=67 // pred_fallthru
                _
            $region68: #{dyn_growing_hnn_forward.3} parent=63 // pred_fallthru
              _
            // Predicated region
            $region69: #{dyn_growing_hnn_forward.3} parent=63 // pred_check
              _
            $region70: #{dyn_growing_hnn_forward.3} parent=63 // pred_check_branch
              %425 = sbr.rel (0) target = $region72
            $region71: #{dyn_growing_hnn_forward.3} parent=63 // pred_region
              loop: start=0, step=1, limit=1
              $region73: #{dyn_growing_hnn_forward.3} parent=71 // loop_pre_header
                _
              $region74: #{dyn_growing_hnn_forward.3} parent=71 // loop_header
                %s428 = sphi 0, %s432
                %p429 = scmp.ge.s32.totalorder %s428, 1
                %s433 = sphi %s419, %s419
                %s434 = sphi %s416, %s416
              $region75: #{dyn_growing_hnn_forward.3} parent=71 // loop_header_branch
                %431 = sbr.rel (%p429) target = $region79
              $region76: #{dyn_growing_hnn_forward.3} parent=71 // loop_body
                %v435 = vld [vmem:[%s433] sm:$0xf]
                %436 = vst [vmem:[%s434] sm:$0xf] %v435
                %v437 = vld [vmem:[%s433 + $0x4] sm:$0xf]
                %438 = vst [vmem:[%s434 + $0x4] sm:$0xf] %v437
                %v439 = vld [vmem:[%s433 + $0x10] sm:$0xf]
                %440 = vst [vmem:[%s434 + $0x8] sm:$0xf] %v439
                %v441 = vld [vmem:[%s433 + $0x14] sm:$0xf]
                %442 = vst [vmem:[%s434 + $0xc] sm:$0xf] %v441
              $region77: #{dyn_growing_hnn_forward.3} parent=71 // loop_footer
                %s432 = sadd.s32 1, %s428
              $region78: #{dyn_growing_hnn_forward.3} parent=71 // loop_footer_branch
                %427 = sbr.rel target = $region74
              $region79: #{dyn_growing_hnn_forward.3} parent=71 // loop_exit
                _
            $region72: #{dyn_growing_hnn_forward.3} parent=63 // pred_fallthru
              _
          $region64: #{dyn_growing_hnn_forward.3} parent=59 // pred_fallthru
            _
          %470 = vnop
        $region60: #{dyn_growing_hnn_forward.3} parent=55 // pred_fallthru
          _
        // Predicated region
        $region98: #{dyn_growing_hnn_forward.3} parent=55 // pred_check
          %p471 = pneg %p67
        $region99: #{dyn_growing_hnn_forward.3} parent=55 // pred_check_branch
          %473 = sbr.rel (%p471) target = $region101
        $region100: #{dyn_growing_hnn_forward.3} parent=55 // pred_region
          %s474 = sand.u32 %s57, 1
          %s475 = sand.u32 %s57, 1
          %s476 = smul.addr %s475, 32
          %s477 = scalar_lea.vmem [#allocation3], %s476
          %s478 = smul.u32 2, %s21
          %s479 = smul.addr %s478, 8
          %s480 = scalar_lea.vmem %s1, %s479
          // Predicated region
          $region102: #{dyn_growing_hnn_forward.3} parent=100 // pred_check
            _
          $region103: #{dyn_growing_hnn_forward.3} parent=100 // pred_check_branch
            %482 = sbr.rel (0) target = $region105
          $region104: #{dyn_growing_hnn_forward.3} parent=100 // pred_region
            // Predicated region
            $region106: #{dyn_growing_hnn_forward.3} parent=104 // pred_check
              _
            $region107: #{dyn_growing_hnn_forward.3} parent=104 // pred_check_branch
              %484 = sbr.rel (0) target = $region109
            $region108: #{dyn_growing_hnn_forward.3} parent=104 // pred_region
              // Predicated region
              $region121: #{dyn_growing_hnn_forward.3} parent=108 // pred_check
                _
              $region122: #{dyn_growing_hnn_forward.3} parent=108 // pred_check_branch
                %505 = sbr.rel (0) target = $region124
              $region123: #{dyn_growing_hnn_forward.3} parent=108 // pred_region
                loop: start=0, step=1, limit=1
                $region125: #{dyn_growing_hnn_forward.3} parent=123 // loop_pre_header
                  _
                $region126: #{dyn_growing_hnn_forward.3} parent=123 // loop_header
                  %s507 = sphi 0, %s511
                  %p508 = scmp.ge.s32.totalorder %s507, 1
                  %s512 = sphi %s480, %s480
                  %s513 = sphi %s477, %s477
                $region127: #{dyn_growing_hnn_forward.3} parent=123 // loop_header_branch
                  %510 = sbr.rel (%p508) target = $region131
                $region128: #{dyn_growing_hnn_forward.3} parent=123 // loop_body
                  %v514 = vld [vmem:[%s512] sm:$0xff]
                  %515 = vst [vmem:[%s513] sm:$0xff] %v514
                  %v516 = vld [vmem:[%s512 + $0x8] sm:$0xff]
                  %517 = vst [vmem:[%s513 + $0x8] sm:$0xff] %v516
                  %v518 = vld [vmem:[%s512 + $0x20] sm:$0xff]
                  %519 = vst [vmem:[%s513 + $0x10] sm:$0xff] %v518
                  %v520 = vld [vmem:[%s512 + $0x28] sm:$0xff]
                  %521 = vst [vmem:[%s513 + $0x18] sm:$0xff] %v520
                $region129: #{dyn_growing_hnn_forward.3} parent=123 // loop_footer
                  %s511 = sadd.s32 1, %s507
                $region130: #{dyn_growing_hnn_forward.3} parent=123 // loop_footer_branch
                  %506 = sbr.rel target = $region126
                $region131: #{dyn_growing_hnn_forward.3} parent=123 // loop_exit
                  _
              $region124: #{dyn_growing_hnn_forward.3} parent=108 // pred_fallthru
                _
              // Predicated region
              $region132: #{dyn_growing_hnn_forward.3} parent=108 // pred_check
                _
              $region133: #{dyn_growing_hnn_forward.3} parent=108 // pred_check_branch
                %523 = sbr.rel target = $region135
              $region134: #{dyn_growing_hnn_forward.3} parent=108 // pred_region
                _
              $region135: #{dyn_growing_hnn_forward.3} parent=108 // pred_fallthru
                _
            $region109: #{dyn_growing_hnn_forward.3} parent=104 // pred_fallthru
              _
            // Predicated region
            $region110: #{dyn_growing_hnn_forward.3} parent=104 // pred_check
              _
            $region111: #{dyn_growing_hnn_forward.3} parent=104 // pred_check_branch
              %486 = sbr.rel target = $region113
            $region112: #{dyn_growing_hnn_forward.3} parent=104 // pred_region
              loop: start=0, step=1, limit=1
              $region114: #{dyn_growing_hnn_forward.3} parent=112 // loop_pre_header
                _
              $region115: #{dyn_growing_hnn_forward.3} parent=112 // loop_header
                %s489 = sphi 0, %s493
                %p490 = scmp.ge.s32.totalorder %s489, 1
                %s494 = sphi %s480, %s480
                %s495 = sphi %s477, %s477
              $region116: #{dyn_growing_hnn_forward.3} parent=112 // loop_header_branch
                %492 = sbr.rel (%p490) target = $region120
              $region117: #{dyn_growing_hnn_forward.3} parent=112 // loop_body
                %v496 = vld [vmem:[%s494] sm:$0xff]
                %497 = vst [vmem:[%s495] sm:$0xff] %v496
                %v498 = vld [vmem:[%s494 + $0x8] sm:$0xff]
                %499 = vst [vmem:[%s495 + $0x8] sm:$0xff] %v498
                %v500 = vld [vmem:[%s494 + $0x20] sm:$0xff]
                %501 = vst [vmem:[%s495 + $0x10] sm:$0xff] %v500
                %v502 = vld [vmem:[%s494 + $0x28] sm:$0xff]
                %503 = vst [vmem:[%s495 + $0x18] sm:$0xff] %v502
              $region118: #{dyn_growing_hnn_forward.3} parent=112 // loop_footer
                %s493 = sadd.s32 1, %s489
              $region119: #{dyn_growing_hnn_forward.3} parent=112 // loop_footer_branch
                %488 = sbr.rel target = $region115
              $region120: #{dyn_growing_hnn_forward.3} parent=112 // loop_exit
                _
            $region113: #{dyn_growing_hnn_forward.3} parent=104 // pred_fallthru
              _
          $region105: #{dyn_growing_hnn_forward.3} parent=100 // pred_fallthru
            _
          %524 = vnop
        $region101: #{dyn_growing_hnn_forward.3} parent=55 // pred_fallthru
          _
        // Predicated region
        $region136: #{dyn_growing_hnn_forward.3} parent=55 // pred_check
          %p525 = pneg %p261
        $region137: #{dyn_growing_hnn_forward.3} parent=55 // pred_check_branch
          %527 = sbr.rel (%p525) target = $region139
        $region138: #{dyn_growing_hnn_forward.3} parent=55 // pred_region
          %s528 = smul.u32 2, %s21
          %p529 = scmp.lt.s32.totalorder %s528, 3
          %s530 = scalar_select %p529, %s528, 3
          %s531 = smul.addr %s530, 8
          %s532 = scalar_lea.vmem %s10, %s531
          %s533 = smul.u32 2, %s21
        $region139: #{dyn_growing_hnn_forward.3} parent=55 // pred_fallthru
          _
      $region56: #{dyn_growing_hnn_forward.3} parent=5 // pred_fallthru
        _
      %p534 = scmp.le.s32.totalorder 1, %s21
      %p535 = scmp.lt.s32.totalorder %s21, 3
      %p536 = pnand %p534, %p535
      %p537 = pneg %p536
      // Predicated region
      $region140: #{dyn_growing_hnn_forward.3} parent=5 // pred_check
        _
      $region141: #{dyn_growing_hnn_forward.3} parent=5 // pred_check_branch
        %539 = sbr.rel (%p536) target = $region143
      $region142: #{dyn_growing_hnn_forward.3} parent=5 // pred_region
        %s540 = ssub.s32 %s21, 1
        %s541 = sand.u32 %s34, 1
        %s542 = sand.u32 %s34, 1
        %s543 = smul.addr %s542, 16
        %s544 = scalar_lea.vmem [#allocation2], %s543
        // Predicated region
        $region144: #{dyn_growing_hnn_forward.3} parent=142 // pred_check
          %p545 = pneg %p47
        $region145: #{dyn_growing_hnn_forward.3} parent=142 // pred_check_branch
          %547 = sbr.rel (%p545) target = $region147
        $region146: #{dyn_growing_hnn_forward.3} parent=142 // pred_region
          _
        $region147: #{dyn_growing_hnn_forward.3} parent=142 // pred_fallthru
          _
        %s548 = sand.u32 %s60, 1
        %s549 = sand.u32 %s60, 1
        %s550 = smul.addr %s549, 32
        %s551 = scalar_lea.vmem [#allocation3], %s550
        // Predicated region
        $region148: #{dyn_growing_hnn_forward.3} parent=142 // pred_check
          %p552 = pneg %p73
        $region149: #{dyn_growing_hnn_forward.3} parent=142 // pred_check_branch
          %554 = sbr.rel (%p552) target = $region151
        $region150: #{dyn_growing_hnn_forward.3} parent=142 // pred_region
          _
        $region151: #{dyn_growing_hnn_forward.3} parent=142 // pred_fallthru
          _
        %s555 = sand.u32 %s34, 1
        %s556 = sand.u32 %s34, 1
        %s557 = smul.addr %s556, 16
        %s558 = scalar_lea.vmem [#allocation2], %s557
        %p559 = pneg %p47
        %p560 = pneg %p44
        %s561 = sand.u32 %s60, 1
        %s562 = sand.u32 %s60, 1
        %s563 = smul.addr %s562, 32
        %s564 = scalar_lea.vmem [#allocation3], %s563
        %p565 = pneg %p73
        %p566 = pneg %p70
        %p567 = pneg %p94
        %p568 = pneg %p91
        %p569 = pneg %p115
        %p570 = pneg %p112
        %p571 = pneg %p136
        %p572 = pneg %p133
        %p573 = pneg %p157
        %p574 = pneg %p154
        %p575 = pneg %p178
        %p576 = pneg %p175
        %p577 = pneg %p199
        %p578 = pneg %p196
        %p579 = pneg %p220
        %p580 = pneg %p217
        %p581 = pneg %p241
        %p582 = pneg %p238
        %s583 = smul.u32 2, %s26
        %p584 = scmp.lt.s32.totalorder %s583, 3
        %s585 = scalar_select %p584, %s583, 3
        %s586 = smul.addr %s585, 8
        %s587 = scalar_lea.vmem %s10, %s586
        %p588 = pneg %p267
        %p589 = pneg %p264
        %p590 = pneg %p288
        %p591 = pneg %p285
        %p592 = pneg %p309
        %p593 = pneg %p306
        %p594 = pneg %p335
        %p595 = pneg %p332
        %s596 = smul.u32 2, %s26
        %p597 = scmp.lt.s32.totalorder %s596, 3
        %s598 = scalar_select %p597, %s596, 3
        %s599 = smul.addr %s598, 8
        %s600 = scalar_lea.vmem %s13, %s599
        %p601 = pneg %p361
        %p602 = pneg %p358
        %s603 = smul.u32 2, %s26
        %p604 = scmp.lt.s32.totalorder %s603, 3
        %s605 = scalar_select %p604, %s603, 3
        %s606 = smul.addr %s605, 8
        %s607 = scalar_lea.vmem %s14, %s606
        %s608 = smul.u32 2, %s26
        %s609 = smul.u32 2, %s26
        %s610 = smul.u32 2, %s26
        %p611 = scmp.lt.s32.totalorder %s610, 3
        %s612 = scalar_select %p611, %s610, 3
        %s613 = smul.addr %s612, 8
        %s614 = scalar_lea.vmem %s10, %s613
        %s615 = smul.u32 2, %s26
        %s616 = smul.u32 2, %s26
        %p617 = scmp.lt.s32.totalorder %s616, 3
        %s618 = scalar_select %p617, %s616, 3
        %s619 = smul.addr %s618, 8
        %s620 = scalar_lea.vmem %s13, %s619
        %s621 = smul.u32 2, %s26
        %s622 = smul.u32 2, %s26
        %p623 = scmp.lt.s32.totalorder %s622, 3
        %s624 = scalar_select %p623, %s622, 3
        %s625 = smul.addr %s624, 8
        %s626 = scalar_lea.vmem %s14, %s625
        %s627 = smul.u32 2, %s26
        %v629 = vld [vmem:[%s2] sm:$0xff]
        %v630 = vld [vmem:[%s2 + $0x8] sm:$0xff]
        %v631 = vpack.c.bf16 %v629, %v629
        %v632 = vpack.c.bf16 %v630, %v630
        %v633 = vld [vmem:[%s544] sm:$0xf]
        %v634 = vld [vmem:[%s544 + $0x4] sm:$0xf]
        %v637 = vunpack.c.l.b16 %v633
        %v638 = vunpack.c.l.b16 %v634
        %v639 = vpack.c.b16 %v638, %v637
        %vm640 = vcmask 64512
        %v642 = vsel %vm640, %v639, 0
        %vm644 = vcmask 1043456
        %v646 = vsel %vm644, %v631, 0
        %648 = vmatprep.subr.bf16.mxu0 0
        %649 = vmatpush1.bf16.msra.mxu0 %v646
        %650 = vmatprep.subr.bf16.mxu0 0
        %651 = vmatpush1.bf16.msra.mxu0 0
        %652 = vmatprep.subr.bf16.mxu0 0
        %653 = vmatpush1.bf16.msra.mxu0 0
        %654 = vmatprep.subr.bf16.mxu0 0
        %655 = vmatpush1.bf16.msra.mxu0 0
        %656 = vmatprep.subr.bf16.mxu0 0
        %657 = vmatpush1.bf16.msra.mxu0 0
        %658 = vmatprep.subr.bf16.mxu0 0
        %659 = vmatpush1.bf16.msra.mxu0 0
        %660 = vmatprep.subr.bf16.mxu0 0
        %661 = vmatpush1.bf16.msra.mxu0 0
        %662 = vmatprep.subr.bf16.mxu0 0
        %663 = vmatpush1.bf16.msra.mxu0 0
        %664 = vmatprep.subr.bf16.mxu0 0
        %665 = vmatpush1.bf16.msra.mxu0 0
        %666 = vmatprep.subr.bf16.mxu0 0
        %667 = vmatpush1.bf16.msra.mxu0 0
        %668 = vmatprep.subr.bf16.mxu0 0
        %669 = vmatpush1.bf16.msra.mxu0 0
        %670 = vmatprep.subr.bf16.mxu0 0
        %671 = vmatpush1.bf16.msra.mxu0 0
        %672 = vmatprep.subr.bf16.mxu0 0
        %673 = vmatpush1.bf16.msra.mxu0 0
        %674 = vmatprep.subr.bf16.mxu0 0
        %675 = vmatpush1.bf16.msra.mxu0 0
        %676 = vmatprep.subr.bf16.mxu0 0
        %677 = vmatpush1.bf16.msra.mxu0 0
        %678 = vmatprep.subr.bf16.mxu0 0
        %679 = vmatpush1.bf16.msra.mxu0 0
        %680 = vmatprep.mubr.bf16.mxu0 0
        %681 = vmatmul.mubr.bf16.gmra.mrb[0].mxu0 %v642
        %v682 = vpop.f32.mrb[0].mxu0
        %v683 = vadd.f32 0.0, %v682
        %v684 = vpop.f32.mrb[0].mxu0
        %v685 = vpop.f32.mrb[0].mxu0
        %v686 = vadd.f32 0.0, %v685
        %v687 = vpop.f32.mrb[0].mxu0
        %688 = vdwg.mxu0
        %v689 = vld [vmem:[%s551] sm:$0xff]
        %v690 = vld [vmem:[%s551 + $0x8] sm:$0xff]
        %692 = vset.pattern.permute.xlu0 0
        %693 = vperm.xlu0 %692, %v689
        %v694 = vpop.permute.xlu0 %693
        %697 = vset.pattern.permute.xlu0 0
        %698 = vperm.xlu0 %697, %v690
        %v699 = vpop.permute.xlu0 %698
        %v701 = vmul.f32 %v683, %v694
        %v702 = vmul.f32 %v686, %v699
        %v703 = vld [vmem:[%s3] sm:$0x1]
        %v705 = vlaneseq
        %v706 = vshrl.u32 %v705, 7
        %v707 = vsub.s32 0, %v706
        %v708 = vrot.slane %v703, %v707
        %v710 = vadd.f32 %v701, %v708
        %v711 = vadd.f32 %v702, %v708
        %v712 = vld [vmem:[%s4] sm:$0xff]
        %v713 = vld [vmem:[%s4 + $0x8] sm:$0xff]
        %v714 = vld [vmem:[%s4 + $0x10] sm:$0xff]
        %v715 = vld [vmem:[%s4 + $0x18] sm:$0xff]
        %s716 = scalar_lea.vmem %s544, 8 [#allocation2]
        %v717 = vld [vmem:[%s716] sm:$0xf]
        %v718 = vld [vmem:[%s716 + $0x4] sm:$0xf]
        %v721 = vunpack.c.l.b16 %v717
        %v722 = vunpack.c.l.b16 %v718
        %v723 = vpack.c.b16 %v722, %v721
        %v725 = vsel %vm640, %v723, 0
        %v728 = vsel %vm644, %v632, 0
        %730 = vmatprep.subr.bf16.mxu0 0
        %731 = vmatpush1.bf16.msra.mxu0 %v728
        %732 = vmatprep.subr.bf16.mxu0 0
        %733 = vmatpush1.bf16.msra.mxu0 0
        %734 = vmatprep.subr.bf16.mxu0 0
        %735 = vmatpush1.bf16.msra.mxu0 0
        %736 = vmatprep.subr.bf16.mxu0 0
        %737 = vmatpush1.bf16.msra.mxu0 0
        %738 = vmatprep.subr.bf16.mxu0 0
        %739 = vmatpush1.bf16.msra.mxu0 0
        %740 = vmatprep.subr.bf16.mxu0 0
        %741 = vmatpush1.bf16.msra.mxu0 0
        %742 = vmatprep.subr.bf16.mxu0 0
        %743 = vmatpush1.bf16.msra.mxu0 0
        %744 = vmatprep.subr.bf16.mxu0 0
        %745 = vmatpush1.bf16.msra.mxu0 0
        %746 = vmatprep.subr.bf16.mxu0 0
        %747 = vmatpush1.bf16.msra.mxu0 0
        %748 = vmatprep.subr.bf16.mxu0 0
        %749 = vmatpush1.bf16.msra.mxu0 0
        %750 = vmatprep.subr.bf16.mxu0 0
        %751 = vmatpush1.bf16.msra.mxu0 0
        %752 = vmatprep.subr.bf16.mxu0 0
        %753 = vmatpush1.bf16.msra.mxu0 0
        %754 = vmatprep.subr.bf16.mxu0 0
        %755 = vmatpush1.bf16.msra.mxu0 0
        %756 = vmatprep.subr.bf16.mxu0 0
        %757 = vmatpush1.bf16.msra.mxu0 0
        %758 = vmatprep.subr.bf16.mxu0 0
        %759 = vmatpush1.bf16.msra.mxu0 0
        %760 = vmatprep.subr.bf16.mxu0 0
        %761 = vmatpush1.bf16.msra.mxu0 0
        %762 = vmatprep.mubr.bf16.mxu0 0
        %763 = vmatmul.mubr.bf16.gmra.mrb[0].mxu0 %v725
        %v764 = vpop.f32.mrb[0].mxu0
        %v765 = vadd.f32 0.0, %v764
        %v766 = vpop.f32.mrb[0].mxu0
        %v767 = vpop.f32.mrb[0].mxu0
        %v768 = vadd.f32 0.0, %v767
        %v769 = vpop.f32.mrb[0].mxu0
        %770 = vdwg.mxu0
        %s771 = scalar_lea.vmem %s551, 16 [#allocation3]
        %v772 = vld [vmem:[%s771] sm:$0xff]
        %v773 = vld [vmem:[%s771 + $0x8] sm:$0xff]
        %775 = vset.pattern.permute.xlu0 0
        %776 = vperm.xlu0 %775, %v772
        %v777 = vpop.permute.xlu0 %776
        %780 = vset.pattern.permute.xlu0 0
        %781 = vperm.xlu0 %780, %v773
        %v782 = vpop.permute.xlu0 %781
        %v784 = vmul.f32 %v765, %v777
        %v785 = vmul.f32 %v768, %v782
        %s786 = scalar_lea.vmem %s3, 1
        %v787 = vld [vmem:[%s786] sm:$0x1]
        %v789 = vlaneseq
        %v790 = vshrl.u32 %v789, 7
        %v791 = vsub.s32 0, %v790
        %v792 = vrot.slane %v787, %v791
        %v794 = vadd.f32 %v784, %v792
        %v795 = vadd.f32 %v785, %v792
        %s796 = scalar_lea.vmem %s4, 32
        %v797 = vld [vmem:[%s796] sm:$0xff]
        %v798 = vld [vmem:[%s796 + $0x8] sm:$0xff]
        %v799 = vld [vmem:[%s796 + $0x10] sm:$0xff]
        %v800 = vld [vmem:[%s796 + $0x18] sm:$0xff]
        %vm801 = vcmask 261120
        %v803 = vsel %vm801, %v794, 0
        %v806 = vsel %vm801, %v795, 0
        %808 = vmatprep.subr.mxu0 0.0
        %809 = vmatpush1.msra.mxu0 %v797
        %810 = vmatprep.subr.mxu0 0.0
        %811 = vmatpush1.msra.mxu0 %v798
        %812 = vmatprep.subr.mxu0 0.0
        %813 = vmatpush1.msra.mxu0 %v799
        %814 = vmatprep.subr.mxu0 0.0
        %815 = vmatpush1.msra.mxu0 %v800
        %816 = vmatprep.subr.mxu0 0.0
        %817 = vmatpush1.msra.mxu0 0.0
        %818 = vmatprep.subr.mxu0 0.0
        %819 = vmatpush1.msra.mxu0 0.0
        %820 = vmatprep.subr.mxu0 0.0
        %821 = vmatpush1.msra.mxu0 0.0
        %822 = vmatprep.subr.mxu0 0.0
        %823 = vmatpush1.msra.mxu0 0.0
        %824 = vmatprep.subr.mxu0 0.0
        %825 = vmatpush1.msra.mxu0 0.0
        %826 = vmatprep.subr.mxu0 0.0
        %827 = vmatpush1.msra.mxu0 0.0
        %828 = vmatprep.subr.mxu0 0.0
        %829 = vmatpush1.msra.mxu0 0.0
        %830 = vmatprep.subr.mxu0 0.0
        %831 = vmatpush1.msra.mxu0 0.0
        %832 = vmatprep.subr.mxu0 0.0
        %833 = vmatpush1.msra.mxu0 0.0
        %834 = vmatprep.subr.mxu0 0.0
        %835 = vmatpush1.msra.mxu0 0.0
        %836 = vmatprep.subr.mxu0 0.0
        %837 = vmatpush1.msra.mxu0 0.0
        %838 = vmatprep.subr.mxu0 0.0
        %839 = vmatpush1.msra.mxu0 0.0
        %840 = vmatprep.subr.mxu0 0.0
        %841 = vmatpush1.msra.mxu0 0.0
        %842 = vmatprep.subr.mxu0 0.0
        %843 = vmatpush1.msra.mxu0 0.0
        %844 = vmatprep.subr.mxu0 0.0
        %845 = vmatpush1.msra.mxu0 0.0
        %846 = vmatprep.subr.mxu0 0.0
        %847 = vmatpush1.msra.mxu0 0.0
        %848 = vmatprep.subr.mxu0 0.0
        %849 = vmatpush1.msra.mxu0 0.0
        %850 = vmatprep.subr.mxu0 0.0
        %851 = vmatpush1.msra.mxu0 0.0
        %852 = vmatprep.subr.mxu0 0.0
        %853 = vmatpush1.msra.mxu0 0.0
        %854 = vmatprep.subr.mxu0 0.0
        %855 = vmatpush1.msra.mxu0 0.0
        %856 = vmatprep.subr.mxu0 0.0
        %857 = vmatpush1.msra.mxu0 0.0
        %858 = vmatprep.subr.mxu0 0.0
        %859 = vmatpush1.msra.mxu0 0.0
        %860 = vmatprep.subr.mxu0 0.0
        %861 = vmatpush1.msra.mxu0 0.0
        %862 = vmatprep.subr.mxu0 0.0
        %863 = vmatpush1.msra.mxu0 0.0
        %864 = vmatprep.subr.mxu0 0.0
        %865 = vmatpush1.msra.mxu0 0.0
        %866 = vmatprep.subr.mxu0 0.0
        %867 = vmatpush1.msra.mxu0 0.0
        %868 = vmatprep.subr.mxu0 0.0
        %869 = vmatpush1.msra.mxu0 0.0
        %870 = vmatprep.subr.mxu0 0.0
        %871 = vmatpush1.msra.mxu0 0.0
        %872 = vmatprep.mubr.f32.mxu0 0.0
        %873 = vmatmul.mubr.f32.gmra.mrb[0].mxu0 %v803
        %v874 = vpop.f32.mrb[0].mxu0
        %v875 = vadd.f32 0.0, %v874
        %v876 = vpop.f32.mrb[0].mxu0
        %877 = vmatprep.mubr.f32.mxu0 0.0
        %878 = vmatmul.mubr.f32.gmra.mrb[0].mxu0 %v806
        %v879 = vpop.f32.mrb[0].mxu0
        %v880 = vadd.f32 0.0, %v879
        %v881 = vpop.f32.mrb[0].mxu0
        %882 = vdwg.mxu0
        %v884 = vsel %vm801, %v710, 0
        %v887 = vsel %vm801, %v711, 0
        %889 = vmatprep.subr.mxu0 0.0
        %890 = vmatpush1.msra.mxu0 %v712
        %891 = vmatprep.subr.mxu0 0.0
        %892 = vmatpush1.msra.mxu0 %v713
        %893 = vmatprep.subr.mxu0 0.0
        %894 = vmatpush1.msra.mxu0 %v714
        %895 = vmatprep.subr.mxu0 0.0
        %896 = vmatpush1.msra.mxu0 %v715
        %897 = vmatprep.subr.mxu0 0.0
        %898 = vmatpush1.msra.mxu0 0.0
        %899 = vmatprep.subr.mxu0 0.0
        %900 = vmatpush1.msra.mxu0 0.0
        %901 = vmatprep.subr.mxu0 0.0
        %902 = vmatpush1.msra.mxu0 0.0
        %903 = vmatprep.subr.mxu0 0.0
        %904 = vmatpush1.msra.mxu0 0.0
        %905 = vmatprep.subr.mxu0 0.0
        %906 = vmatpush1.msra.mxu0 0.0
        %907 = vmatprep.subr.mxu0 0.0
        %908 = vmatpush1.msra.mxu0 0.0
        %909 = vmatprep.subr.mxu0 0.0
        %910 = vmatpush1.msra.mxu0 0.0
        %911 = vmatprep.subr.mxu0 0.0
        %912 = vmatpush1.msra.mxu0 0.0
        %913 = vmatprep.subr.mxu0 0.0
        %914 = vmatpush1.msra.mxu0 0.0
        %915 = vmatprep.subr.mxu0 0.0
        %916 = vmatpush1.msra.mxu0 0.0
        %917 = vmatprep.subr.mxu0 0.0
        %918 = vmatpush1.msra.mxu0 0.0
        %919 = vmatprep.subr.mxu0 0.0
        %920 = vmatpush1.msra.mxu0 0.0
        %921 = vmatprep.subr.mxu0 0.0
        %922 = vmatpush1.msra.mxu0 0.0
        %923 = vmatprep.subr.mxu0 0.0
        %924 = vmatpush1.msra.mxu0 0.0
        %925 = vmatprep.subr.mxu0 0.0
        %926 = vmatpush1.msra.mxu0 0.0
        %927 = vmatprep.subr.mxu0 0.0
        %928 = vmatpush1.msra.mxu0 0.0
        %929 = vmatprep.subr.mxu0 0.0
        %930 = vmatpush1.msra.mxu0 0.0
        %931 = vmatprep.subr.mxu0 0.0
        %932 = vmatpush1.msra.mxu0 0.0
        %933 = vmatprep.subr.mxu0 0.0
        %934 = vmatpush1.msra.mxu0 0.0
        %935 = vmatprep.subr.mxu0 0.0
        %936 = vmatpush1.msra.mxu0 0.0
        %937 = vmatprep.subr.mxu0 0.0
        %938 = vmatpush1.msra.mxu0 0.0
        %939 = vmatprep.subr.mxu0 0.0
        %940 = vmatpush1.msra.mxu0 0.0
        %941 = vmatprep.subr.mxu0 0.0
        %942 = vmatpush1.msra.mxu0 0.0
        %943 = vmatprep.subr.mxu0 0.0
        %944 = vmatpush1.msra.mxu0 0.0
        %945 = vmatprep.subr.mxu0 0.0
        %946 = vmatpush1.msra.mxu0 0.0
        %947 = vmatprep.subr.mxu0 0.0
        %948 = vmatpush1.msra.mxu0 0.0
        %949 = vmatprep.subr.mxu0 0.0
        %950 = vmatpush1.msra.mxu0 0.0
        %951 = vmatprep.subr.mxu0 0.0
        %952 = vmatpush1.msra.mxu0 0.0
        %953 = vmatprep.mubr.f32.mxu0 0.0
        %954 = vmatmul.mubr.f32.gmra.mrb[0].mxu0 %v884
        %v955 = vpop.f32.mrb[0].mxu0
        %v956 = vadd.f32 %v875, %v955
        %v957 = vpop.f32.mrb[0].mxu0
        %958 = vmatprep.mubr.f32.mxu0 0.0
        %959 = vmatmul.mubr.f32.gmra.mrb[0].mxu0 %v887
        %v960 = vpop.f32.mrb[0].mxu0
        %v961 = vadd.f32 %v880, %v960
        %v962 = vpop.f32.mrb[0].mxu0
        %963 = vdwg.mxu0
        %v964 = vld [vmem:[%s5] sm:$0x1]
        %v966 = vlaneseq
        %v967 = vshrl.u32 %v966, 7
        %v968 = vsub.s32 0, %v967
        %v969 = vrot.slane %v964, %v968
        %v971 = vadd.f32 %v956, %v969
        %v972 = vadd.f32 %v961, %v969
        %v973 = vmax.f32 %v971, 0.0
        %v974 = vmax.f32 %v972, 0.0
        %v975 = vld [vmem:[%s614] sm:$0xff]
        %v976 = vld [vmem:[%s614 + $0x8] sm:$0xff]
        %v977 = vld [vmem:[%s6] sm:$0xff]
        %v978 = vld [vmem:[%s6 + $0x8] sm:$0xff]
        %v979 = vld [vmem:[%s6 + $0x10] sm:$0xff]
        %v980 = vld [vmem:[%s6 + $0x18] sm:$0xff]
        %v981 = vld [vmem:[%s7] sm:$0x1]
        %v983 = vlaneseq
        %v984 = vshrl.u32 %v983, 7
        %v985 = vsub.s32 0, %v984
        %v986 = vrot.slane %v981, %v985
        %v989 = vsel %vm801, %v973, 0
        %v992 = vsel %vm801, %v974, 0
        %994 = vmatprep.subr.mxu0 0.0
        %995 = vmatpush1.msra.mxu0 %v977
        %996 = vmatprep.subr.mxu0 0.0
        %997 = vmatpush1.msra.mxu0 %v978
        %998 = vmatprep.subr.mxu0 0.0
        %999 = vmatpush1.msra.mxu0 %v979
        %1000 = vmatprep.subr.mxu0 0.0
        %1001 = vmatpush1.msra.mxu0 %v980
        %1002 = vmatprep.subr.mxu0 0.0
        %1003 = vmatpush1.msra.mxu0 0.0
        %1004 = vmatprep.subr.mxu0 0.0
        %1005 = vmatpush1.msra.mxu0 0.0
        %1006 = vmatprep.subr.mxu0 0.0
        %1007 = vmatpush1.msra.mxu0 0.0
        %1008 = vmatprep.subr.mxu0 0.0
        %1009 = vmatpush1.msra.mxu0 0.0
        %1010 = vmatprep.subr.mxu0 0.0
        %1011 = vmatpush1.msra.mxu0 0.0
        %1012 = vmatprep.subr.mxu0 0.0
        %1013 = vmatpush1.msra.mxu0 0.0
        %1014 = vmatprep.subr.mxu0 0.0
        %1015 = vmatpush1.msra.mxu0 0.0
        %1016 = vmatprep.subr.mxu0 0.0
        %1017 = vmatpush1.msra.mxu0 0.0
        %1018 = vmatprep.subr.mxu0 0.0
        %1019 = vmatpush1.msra.mxu0 0.0
        %1020 = vmatprep.subr.mxu0 0.0
        %1021 = vmatpush1.msra.mxu0 0.0
        %1022 = vmatprep.subr.mxu0 0.0
        %1023 = vmatpush1.msra.mxu0 0.0
        %1024 = vmatprep.subr.mxu0 0.0
        %1025 = vmatpush1.msra.mxu0 0.0
        %1026 = vmatprep.subr.mxu0 0.0
        %1027 = vmatpush1.msra.mxu0 0.0
        %1028 = vmatprep.subr.mxu0 0.0
        %1029 = vmatpush1.msra.mxu0 0.0
        %1030 = vmatprep.subr.mxu0 0.0
        %1031 = vmatpush1.msra.mxu0 0.0
        %1032 = vmatprep.subr.mxu0 0.0
        %1033 = vmatpush1.msra.mxu0 0.0
        %1034 = vmatprep.subr.mxu0 0.0
        %1035 = vmatpush1.msra.mxu0 0.0
        %1036 = vmatprep.subr.mxu0 0.0
        %1037 = vmatpush1.msra.mxu0 0.0
        %1038 = vmatprep.subr.mxu0 0.0
        %1039 = vmatpush1.msra.mxu0 0.0
        %1040 = vmatprep.subr.mxu0 0.0
        %1041 = vmatpush1.msra.mxu0 0.0
        %1042 = vmatprep.subr.mxu0 0.0
        %1043 = vmatpush1.msra.mxu0 0.0
        %1044 = vmatprep.subr.mxu0 0.0
        %1045 = vmatpush1.msra.mxu0 0.0
        %1046 = vmatprep.subr.mxu0 0.0
        %1047 = vmatpush1.msra.mxu0 0.0
        %1048 = vmatprep.subr.mxu0 0.0
        %1049 = vmatpush1.msra.mxu0 0.0
        %1050 = vmatprep.subr.mxu0 0.0
        %1051 = vmatpush1.msra.mxu0 0.0
        %1052 = vmatprep.subr.mxu0 0.0
        %1053 = vmatpush1.msra.mxu0 0.0
        %1054 = vmatprep.subr.mxu0 0.0
        %1055 = vmatpush1.msra.mxu0 0.0
        %1056 = vmatprep.subr.mxu0 0.0
        %1057 = vmatpush1.msra.mxu0 0.0
        %1058 = vmatprep.mubr.f32.mxu0 0.0
        %1059 = vmatmul.mubr.f32.gmra.mrb[0].mxu0 %v989
        %v1060 = vpop.f32.mrb[0].mxu0
        %v1061 = vadd.f32 %v986, %v1060
        %v1062 = vpop.f32.mrb[0].mxu0
        %1063 = vmatprep.mubr.f32.mxu0 0.0
        %1064 = vmatmul.mubr.f32.gmra.mrb[0].mxu0 %v992
        %v1065 = vpop.f32.mrb[0].mxu0
        %v1066 = vadd.f32 %v986, %v1065
        %v1067 = vpop.f32.mrb[0].mxu0
        %1068 = vdwg.mxu0
        %v1069 = vld [vmem:[%s8] sm:$0xff]
        %v1070 = vld [vmem:[%s8 + $0x8] sm:$0xff]
        %v1071 = vld [vmem:[%s8 + $0x10] sm:$0xff]
        %v1072 = vld [vmem:[%s8 + $0x18] sm:$0xff]
        %v1073 = vld [vmem:[%s9] sm:$0x1]
        %v1075 = vlaneseq
        %v1076 = vshrl.u32 %v1075, 7
        %v1077 = vsub.s32 0, %v1076
        %v1078 = vrot.slane %v1073, %v1077
        %v1081 = vsel %vm801, %v975, 0
        %v1084 = vsel %vm801, %v976, 0
        %1086 = vmatprep.subr.mxu0 0.0
        %1087 = vmatpush1.msra.mxu0 %v1069
        %1088 = vmatprep.subr.mxu0 0.0
        %1089 = vmatpush1.msra.mxu0 %v1070
        %1090 = vmatprep.subr.mxu0 0.0
        %1091 = vmatpush1.msra.mxu0 %v1071
        %1092 = vmatprep.subr.mxu0 0.0
        %1093 = vmatpush1.msra.mxu0 %v1072
        %1094 = vmatprep.subr.mxu0 0.0
        %1095 = vmatpush1.msra.mxu0 0.0
        %1096 = vmatprep.subr.mxu0 0.0
        %1097 = vmatpush1.msra.mxu0 0.0
        %1098 = vmatprep.subr.mxu0 0.0
        %1099 = vmatpush1.msra.mxu0 0.0
        %1100 = vmatprep.subr.mxu0 0.0
        %1101 = vmatpush1.msra.mxu0 0.0
        %1102 = vmatprep.subr.mxu0 0.0
        %1103 = vmatpush1.msra.mxu0 0.0
        %1104 = vmatprep.subr.mxu0 0.0
        %1105 = vmatpush1.msra.mxu0 0.0
        %1106 = vmatprep.subr.mxu0 0.0
        %1107 = vmatpush1.msra.mxu0 0.0
        %1108 = vmatprep.subr.mxu0 0.0
        %1109 = vmatpush1.msra.mxu0 0.0
        %1110 = vmatprep.subr.mxu0 0.0
        %1111 = vmatpush1.msra.mxu0 0.0
        %1112 = vmatprep.subr.mxu0 0.0
        %1113 = vmatpush1.msra.mxu0 0.0
        %1114 = vmatprep.subr.mxu0 0.0
        %1115 = vmatpush1.msra.mxu0 0.0
        %1116 = vmatprep.subr.mxu0 0.0
        %1117 = vmatpush1.msra.mxu0 0.0
        %1118 = vmatprep.subr.mxu0 0.0
        %1119 = vmatpush1.msra.mxu0 0.0
        %1120 = vmatprep.subr.mxu0 0.0
        %1121 = vmatpush1.msra.mxu0 0.0
        %1122 = vmatprep.subr.mxu0 0.0
        %1123 = vmatpush1.msra.mxu0 0.0
        %1124 = vmatprep.subr.mxu0 0.0
        %1125 = vmatpush1.msra.mxu0 0.0
        %1126 = vmatprep.subr.mxu0 0.0
        %1127 = vmatpush1.msra.mxu0 0.0
        %1128 = vmatprep.subr.mxu0 0.0
        %1129 = vmatpush1.msra.mxu0 0.0
        %1130 = vmatprep.subr.mxu0 0.0
        %1131 = vmatpush1.msra.mxu0 0.0
        %1132 = vmatprep.subr.mxu0 0.0
        %1133 = vmatpush1.msra.mxu0 0.0
        %1134 = vmatprep.subr.mxu0 0.0
        %1135 = vmatpush1.msra.mxu0 0.0
        %1136 = vmatprep.subr.mxu0 0.0
        %1137 = vmatpush1.msra.mxu0 0.0
        %1138 = vmatprep.subr.mxu0 0.0
        %1139 = vmatpush1.msra.mxu0 0.0
        %1140 = vmatprep.subr.mxu0 0.0
        %1141 = vmatpush1.msra.mxu0 0.0
        %1142 = vmatprep.subr.mxu0 0.0
        %1143 = vmatpush1.msra.mxu0 0.0
        %1144 = vmatprep.subr.mxu0 0.0
        %1145 = vmatpush1.msra.mxu0 0.0
        %1146 = vmatprep.subr.mxu0 0.0
        %1147 = vmatpush1.msra.mxu0 0.0
        %1148 = vmatprep.subr.mxu0 0.0
        %1149 = vmatpush1.msra.mxu0 0.0
        %1150 = vmatprep.mubr.f32.mxu0 0.0
        %1151 = vmatmul.mubr.f32.gmra.mrb[0].mxu0 %v1081
        %v1152 = vpop.f32.mrb[0].mxu0
        %v1153 = vadd.f32 %v1078, %v1152
        %v1154 = vpop.f32.mrb[0].mxu0
        %1155 = vmatprep.mubr.f32.mxu0 0.0
        %1156 = vmatmul.mubr.f32.gmra.mrb[0].mxu0 %v1084
        %v1157 = vpop.f32.mrb[0].mxu0
        %v1158 = vadd.f32 %v1078, %v1157
        %v1159 = vpop.f32.mrb[0].mxu0
        %1160 = vdwg.mxu0
        %v1161 = vadd.f32 %v1061, %v1153
        %v1162 = vadd.f32 %v1066, %v1158
        %v1163 = vxor.u32 %v1161, 2147483648
        %v1164 = vxor.u32 %v1162, 2147483648
        %v1165 = vmul.f32 %v1163, 1.442695
        %v1166 = vpow.pop %v1165
        %v1167 = vmul.f32 %v1164, 1.442695
        %v1168 = vpow.pop %v1167
        %v1169 = vadd.f32 %v1166, 1.0
        %v1170 = vadd.f32 %v1168, 1.0
        %v1171 = vrcp.pop %v1169
        %v1172 = vmul.f32 1.0, %v1171
        %v1173 = vrcp.pop %v1170
        %v1174 = vmul.f32 1.0, %v1173
        %1177 = vrot.lane.b32.xlu0 %v1153, 64
        %v1178 = vpop.permute.xlu0 %1177
        %1179 = vrot.lane.b32.xlu0 %v1158, 64
        %v1180 = vpop.permute.xlu0 %1179
        %v1183 = vmul.f32 %v1172, %v1178
        %v1184 = vmul.f32 %v1174, %v1180
        %1187 = vrot.lane.b32.xlu0 %v1183, 64
        %v1188 = vpop.permute.xlu0 %1187
        %1189 = vrot.lane.b32.xlu0 %v1184, 64
        %v1190 = vpop.permute.xlu0 %1189
        %v1193 = vadd.f32 %v1061, %v1188
        %v1194 = vadd.f32 %v1066, %v1190
        %v1195 = vtanh.pop %v1193
        %v1196 = vtanh.pop %v1194
        %v1197 = vsub.f32 1.0, %v1172
        %v1198 = vsub.f32 1.0, %v1174
        %1201 = vrot.lane.b32.xlu0 %v1195, 96
        %v1202 = vpop.permute.xlu0 %1201
        %1203 = vrot.lane.b32.xlu0 %v1196, 96
        %v1204 = vpop.permute.xlu0 %1203
        %v1207 = vmul.f32 %v1197, %v1202
        %v1208 = vmul.f32 %v1198, %v1204
        %1209 = vrot.lane.b32.xlu0 %v975, 32
        %v1210 = vpop.permute.xlu0 %1209
        %1211 = vrot.lane.b32.xlu0 %v976, 32
        %v1212 = vpop.permute.xlu0 %1211
        %v1215 = vmul.f32 %v1172, %v1210
        %v1216 = vmul.f32 %v1174, %v1212
        %v1217 = vadd.f32 %v1207, %v1215
        %v1218 = vadd.f32 %v1208, %v1216
        %1221 = vrot.lane.b32.xlu0 %v1217, 96
        %v1222 = vpop.permute.xlu0 %1221
        %1223 = vrot.lane.b32.xlu0 %v1218, 96
        %v1224 = vpop.permute.xlu0 %1223
        %1227 = vst.msk [vmem:[%s620] sm:$0xff] %vm801, %v1222
        %1228 = vst.msk [vmem:[%s620 + $0x8] sm:$0xff] %vm801, %v1224
        %v1229 = vld [vmem:[%s11] sm:$0xff]
        %v1230 = vld [vmem:[%s11 + $0x8] sm:$0xff]
        %v1231 = vld [vmem:[%s11 + $0x10] sm:$0xff]
        %v1232 = vld [vmem:[%s11 + $0x18] sm:$0xff]
        %v1233 = vld [vmem:[%s12] sm:$0x1]
        %v1235 = vlaneseq
        %v1236 = vshrl.u32 %v1235, 7
        %v1237 = vsub.s32 0, %v1236
        %v1238 = vrot.slane %v1233, %v1237
        %v1240 = vsel %vm801, %v1222, 0
        %v1242 = vsel %vm801, %v1224, 0
        %1244 = vmatprep.subr.mxu0 0.0
        %1245 = vmatpush1.msra.mxu0 %v1229
        %1246 = vmatprep.subr.mxu0 0.0
        %1247 = vmatpush1.msra.mxu0 %v1230
        %1248 = vmatprep.subr.mxu0 0.0
        %1249 = vmatpush1.msra.mxu0 %v1231
        %1250 = vmatprep.subr.mxu0 0.0
        %1251 = vmatpush1.msra.mxu0 %v1232
        %1252 = vmatprep.subr.mxu0 0.0
        %1253 = vmatpush1.msra.mxu0 0.0
        %1254 = vmatprep.subr.mxu0 0.0
        %1255 = vmatpush1.msra.mxu0 0.0
        %1256 = vmatprep.subr.mxu0 0.0
        %1257 = vmatpush1.msra.mxu0 0.0
        %1258 = vmatprep.subr.mxu0 0.0
        %1259 = vmatpush1.msra.mxu0 0.0
        %1260 = vmatprep.subr.mxu0 0.0
        %1261 = vmatpush1.msra.mxu0 0.0
        %1262 = vmatprep.subr.mxu0 0.0
        %1263 = vmatpush1.msra.mxu0 0.0
        %1264 = vmatprep.subr.mxu0 0.0
        %1265 = vmatpush1.msra.mxu0 0.0
        %1266 = vmatprep.subr.mxu0 0.0
        %1267 = vmatpush1.msra.mxu0 0.0
        %1268 = vmatprep.subr.mxu0 0.0
        %1269 = vmatpush1.msra.mxu0 0.0
        %1270 = vmatprep.subr.mxu0 0.0
        %1271 = vmatpush1.msra.mxu0 0.0
        %1272 = vmatprep.subr.mxu0 0.0
        %1273 = vmatpush1.msra.mxu0 0.0
        %1274 = vmatprep.subr.mxu0 0.0
        %1275 = vmatpush1.msra.mxu0 0.0
        %1276 = vmatprep.subr.mxu0 0.0
        %1277 = vmatpush1.msra.mxu0 0.0
        %1278 = vmatprep.subr.mxu0 0.0
        %1279 = vmatpush1.msra.mxu0 0.0
        %1280 = vmatprep.subr.mxu0 0.0
        %1281 = vmatpush1.msra.mxu0 0.0
        %1282 = vmatprep.subr.mxu0 0.0
        %1283 = vmatpush1.msra.mxu0 0.0
        %1284 = vmatprep.subr.mxu0 0.0
        %1285 = vmatpush1.msra.mxu0 0.0
        %1286 = vmatprep.subr.mxu0 0.0
        %1287 = vmatpush1.msra.mxu0 0.0
        %1288 = vmatprep.subr.mxu0 0.0
        %1289 = vmatpush1.msra.mxu0 0.0
        %1290 = vmatprep.subr.mxu0 0.0
        %1291 = vmatpush1.msra.mxu0 0.0
        %1292 = vmatprep.subr.mxu0 0.0
        %1293 = vmatpush1.msra.mxu0 0.0
        %1294 = vmatprep.subr.mxu0 0.0
        %1295 = vmatpush1.msra.mxu0 0.0
        %1296 = vmatprep.subr.mxu0 0.0
        %1297 = vmatpush1.msra.mxu0 0.0
        %1298 = vmatprep.subr.mxu0 0.0
        %1299 = vmatpush1.msra.mxu0 0.0
        %1300 = vmatprep.subr.mxu0 0.0
        %1301 = vmatpush1.msra.mxu0 0.0
        %1302 = vmatprep.subr.mxu0 0.0
        %1303 = vmatpush1.msra.mxu0 0.0
        %1304 = vmatprep.subr.mxu0 0.0
        %1305 = vmatpush1.msra.mxu0 0.0
        %1306 = vmatprep.subr.mxu0 0.0
        %1307 = vmatpush1.msra.mxu0 0.0
        %1308 = vmatprep.mubr.f32.mxu0 0.0
        %1309 = vmatmul.mubr.f32.gmra.mrb[0].mxu0 %v1240
        %v1310 = vpop.f32.mrb[0].mxu0
        %v1311 = vadd.f32 %v1238, %v1310
        %v1312 = vpop.f32.mrb[0].mxu0
        %1313 = vmatprep.mubr.f32.mxu0 0.0
        %1314 = vmatmul.mubr.f32.gmra.mrb[0].mxu0 %v1242
        %v1315 = vpop.f32.mrb[0].mxu0
        %v1316 = vadd.f32 %v1238, %v1315
        %v1317 = vpop.f32.mrb[0].mxu0
        %1318 = vdwg.mxu0
        %1319 = vst.msk [vmem:[%s626] sm:$0xff] %vm801, %v1311
        %1320 = vst.msk [vmem:[%s626 + $0x8] sm:$0xff] %vm801, %v1316
        %s1321 = smul.u32 2, %s26
        %p1322 = scmp.lt.s32.totalorder %s1321, 3
        %s1323 = scalar_select %p1322, %s1321, 3
        %s1324 = smul.addr %s1323, 8
        %s1325 = scalar_lea.vmem %s13, %s1324
        %s1326 = smul.u32 2, %s26
        %p1327 = scmp.lt.s32.totalorder %s1326, 3
        %s1328 = scalar_select %p1327, %s1326, 3
        %s1329 = smul.addr %s1328, 8
        %s1330 = scalar_lea.vmem %s14, %s1329
        // Predicated region
        $region152: #{dyn_growing_hnn_forward.3} parent=142 // pred_check
          %p1331 = pneg %p332
        $region153: #{dyn_growing_hnn_forward.3} parent=142 // pred_check_branch
          %1333 = sbr.rel (%p1331) target = $region155
        $region154: #{dyn_growing_hnn_forward.3} parent=142 // pred_region
          %s1334 = smul.u32 2, %s26
        $region155: #{dyn_growing_hnn_forward.3} parent=142 // pred_fallthru
          _
        // Predicated region
        $region156: #{dyn_growing_hnn_forward.3} parent=142 // pred_check
          %p1335 = pneg %p358
        $region157: #{dyn_growing_hnn_forward.3} parent=142 // pred_check_branch
          %1337 = sbr.rel (%p1335) target = $region159
        $region158: #{dyn_growing_hnn_forward.3} parent=142 // pred_region
          %s1338 = smul.u32 2, %s26
        $region159: #{dyn_growing_hnn_forward.3} parent=142 // pred_fallthru
          _
      $region143: #{dyn_growing_hnn_forward.3} parent=5 // pred_fallthru
        _
      %p1339 = scmp.le.s32.totalorder 2, %s21
      // Predicated region
      $region160: #{dyn_growing_hnn_forward.3} parent=5 // pred_check
        %p1340 = pneg %p1339
      $region161: #{dyn_growing_hnn_forward.3} parent=5 // pred_check_branch
        %1342 = sbr.rel (%p1340) target = $region163
      $region162: #{dyn_growing_hnn_forward.3} parent=5 // pred_region
        %s1343 = ssub.s32 %s21, 2
        // Predicated region
        $region164: #{dyn_growing_hnn_forward.3} parent=162 // pred_check
          %p1344 = pneg %p338
        $region165: #{dyn_growing_hnn_forward.3} parent=162 // pred_check_branch
          %1346 = sbr.rel (%p1344) target = $region167
        $region166: #{dyn_growing_hnn_forward.3} parent=162 // pred_region
          %s1347 = smul.u32 2, %s27
          %p1348 = scmp.lt.s32.totalorder %s1347, 3
          %s1349 = scalar_select %p1348, %s1347, 3
          %s1350 = smul.addr %s1349, 8
          %s1351 = scalar_lea.vmem %s13, %s1350
        $region167: #{dyn_growing_hnn_forward.3} parent=162 // pred_fallthru
          _
        // Predicated region
        $region168: #{dyn_growing_hnn_forward.3} parent=162 // pred_check
          %p1352 = pneg %p364
        $region169: #{dyn_growing_hnn_forward.3} parent=162 // pred_check_branch
          %1354 = sbr.rel (%p1352) target = $region171
        $region170: #{dyn_growing_hnn_forward.3} parent=162 // pred_region
          %s1355 = smul.u32 2, %s27
          %p1356 = scmp.lt.s32.totalorder %s1355, 3
          %s1357 = scalar_select %p1356, %s1355, 3
          %s1358 = smul.addr %s1357, 8
          %s1359 = scalar_lea.vmem %s14, %s1358
        $region171: #{dyn_growing_hnn_forward.3} parent=162 // pred_fallthru
          _
      $region163: #{dyn_growing_hnn_forward.3} parent=5 // pred_fallthru
        _
    $region6: #{dyn_growing_hnn_forward.3} parent=1 // loop_footer
      %s25 = sadd.s32 1, %s21
    $region7: #{dyn_growing_hnn_forward.3} parent=1 // loop_footer_branch
      %20 = sbr.rel target = $region3
    $region8: #{dyn_growing_hnn_forward.3} parent=1 // loop_exit
      _

</llo_original>
